<compile_context>
chip_gen: v6e
topology: v6e:2x2x1
jax: 0.10.0
libtpu: 0.0.40
codegen_flags: <defaults>
</compile_context>

<pallas_src>
import math
import functools

import jax
import jax.numpy as jnp
from jax.experimental import pallas as pl
from jax.experimental.pallas import tpu as pltpu


def mha_kernel(qkv_ref, w_in_ref, b_in_ref, hs_mask_ref, wo_t_ref, bo_ref,
               out_ref, attn_ref, *, batch, seq, d_model, n_heads):
    B, S, D, H = batch, seq, d_model, n_heads
    BS = B * S

    # ---- Fused Q/K/V projection: one (B*S, 3D) @ (3D, 3D) MXU matmul. ----
    x = qkv_ref[...].reshape(BS, 3 * D)                    # [q | k | v] features
    qkv = jnp.dot(x, w_in_ref[...],
                  preferred_element_type=jnp.float32) + b_in_ref[...]
    q_all = qkv[:, :D]          # 1/sqrt(d_k) already folded into Wq^T / bq
    k_all = qkv[:, D:2 * D]
    v_all = qkv[:, 2 * D:]

    # Block-diagonal head mask: row h*S+s keeps only head h's d_k columns.
    hs_mask = hs_mask_ref[...]                             # (H*S, D)

    def expand_heads(xb):
        # (S, D) -> (H*S, D): row h*S+s = x[s] restricted to head h's columns.
        return jnp.broadcast_to(xb[None, :, :], (H, S, D)).reshape(H * S, D) * hs_mask

    ctx_rows = []
    attn_cols = []
    for b in range(B):                                     # static unroll, B tiny
        qb = q_all[b * S:(b + 1) * S, :]                   # sublane-aligned slices
        kb = k_all[b * S:(b + 1) * S, :]
        vb = v_all[b * S:(b + 1) * S, :]

        khat = expand_heads(kb)                            # (H*S, D)
        vhat = expand_heads(vb)                            # (H*S, D)

        # scores[s_q, h*S+s_k] = <Q_h[s_q], K_h[s_k]> / sqrt(d_k)
        # One matmul for ALL heads; transposed-RHS contraction (no explicit K^T).
        scores = jax.lax.dot_general(
            qb, khat, dimension_numbers=(((1,), (1,)), ((), ())),
            preferred_element_type=jnp.float32)            # (S, H*S)

        # Numerically-stable softmax over keys within each head's lane group.
        sg = scores.reshape(S, H, S)
        m = jnp.max(sg, axis=-1, keepdims=True)
        e = jnp.exp(sg - m)
        p = (e / jnp.sum(e, axis=-1, keepdims=True)).reshape(S, H * S)
        attn_cols.append(p)

        # ctx[s_q, h*d_k+j] = sum_k p[s_q, h*S+k] * V_h[k, j]  (one matmul,
        # already in the transpose(1,2).view(B,S,D) column order).
        ctx_rows.append(jnp.dot(p, vhat, preferred_element_type=jnp.float32))

    # Lane-dense attention-weights store: (S, B*H*S); wrapper re-layouts.
    attn_ref[...] = jnp.concatenate(attn_cols, axis=1)

    # Output projection for all batches at once: (B*S, D) @ (D, D).
    ctx = jnp.concatenate(ctx_rows, axis=0)                # (B*S, D)
    out = jnp.dot(ctx, wo_t_ref[...],
                  preferred_element_type=jnp.float32) + bo_ref[...]
    out_ref[...] = out.reshape(B, S, D)


def multi_head_attention(q, k, v, params, n_heads):
    """q, k, v: (B, S, D) float32.  Returns (output (B,S,D), attn (B,H,S,S))."""
    B, S, D = q.shape
    assert D % n_heads == 0
    H = n_heads
    d_k = D // n_heads
    inv_scale = 1.0 / math.sqrt(d_k)
    wq, bq, wk, bk, wv, bv, wo, bo = params
    f32 = jnp.float32

    # ---- Wrapper-side layout plumbing (free XLA ops, outside the kernel) ----
    # Fused projection weight: block-diag(Wq^T/sqrt(d_k), Wk^T, Wv^T), fused bias.
    w_in = jnp.zeros((3 * D, 3 * D), f32)
    w_in = w_in.at[0:D, 0:D].set(wq.T * inv_scale)
    w_in = w_in.at[D:2 * D, D:2 * D].set(wk.T)
    w_in = w_in.at[2 * D:, 2 * D:].set(wv.T)
    b_in = jnp.concatenate([bq * inv_scale, bk, bv], axis=-1)      # (1, 3D)
    wo_t = wo.T

    # Block-diagonal head mask used for the per-head K/V expansion in-kernel.
    head_of_row = jnp.repeat(jnp.arange(H), S)                     # (H*S,)
    head_of_col = jnp.arange(D) // d_k                             # (D,)
    hs_mask = (head_of_row[:, None] == head_of_col[None, :]).astype(f32)

    # Pack q | k | v along features so the kernel does one projection matmul.
    qkv_in = jnp.concatenate([q, k, v], axis=-1)                   # (B, S, 3D)

    kernel = functools.partial(mha_kernel, batch=B, seq=S, d_model=D,
                               n_heads=H)

    # Single grid step: whole problem is ~KiB-scale, so extra grid steps are
    # pure fixed overhead (and with one step nothing is double-buffered).
    out, attn_flat = pl.pallas_call(
        kernel,
        out_shape=(jax.ShapeDtypeStruct((B, S, D), f32),
                   jax.ShapeDtypeStruct((S, B * H * S), f32)),
        grid_spec=pltpu.PrefetchScalarGridSpec(
            num_scalar_prefetch=0,
            grid=(1,),
            in_specs=[
                pl.BlockSpec((B, S, 3 * D), lambda i: (0, 0, 0)),
                pl.BlockSpec((3 * D, 3 * D), lambda i: (0, 0)),
                pl.BlockSpec((1, 3 * D), lambda i: (0, 0)),
                pl.BlockSpec((H * S, D), lambda i: (0, 0)),
                pl.BlockSpec((D, D), lambda i: (0, 0)),
                pl.BlockSpec((1, D), lambda i: (0, 0)),
            ],
            out_specs=[
                pl.BlockSpec((B, S, D), lambda i: (0, 0, 0)),
                pl.BlockSpec((S, B * H * S), lambda i: (0, 0)),
            ],
        ),
        compiler_params=pltpu.CompilerParams(
            dimension_semantics=("arbitrary",)),
    )(qkv_in, w_in, b_in, hs_mask, wo_t, bo)

    # attn_flat[s_q, b*H*S + h*S + s_k] -> (B, H, S, S): pure wrapper re-layout.
    attn = attn_flat.reshape(S, B, H, S).transpose(1, 2, 0, 3)
    return out, attn


def init_params(key, d_model):
    """Deterministic PyTorch-Linear-style init: U(-1/sqrt(in), 1/sqrt(in))."""
    bound = 1.0 / math.sqrt(d_model)
    keys = jax.random.split(key, 8)

    def lin(kw, kb):
        w = jax.random.uniform(kw, (d_model, d_model), jnp.float32, -bound, bound)
        b = jax.random.uniform(kb, (1, d_model), jnp.float32, -bound, bound)
        return w, b

    wq, bq = lin(keys[0], keys[1])
    wk, bk = lin(keys[2], keys[3])
    wv, bv = lin(keys[4], keys[5])
    wo, bo = lin(keys[6], keys[7])
    return (wq, bq, wk, bk, wv, bv, wo, bo)


def reference_mha(q, k, v, params, n_heads):
    """Pure-JAX reference mirroring the PyTorch forward (eval mode, mask=None)."""
    wq, bq, wk, bk, wv, bv, wo, bo = params
    B, S, D = q.shape
    d_k = D // n_heads
    scale = math.sqrt(d_k)

    def proj(x, w, b):
        return x @ w.T + b[0]

    Q = proj(q, wq, bq).reshape(B, S, n_heads, d_k).transpose(0, 2, 1, 3)
    K = proj(k, wk, bk).reshape(B, S, n_heads, d_k).transpose(0, 2, 1, 3)
    V = proj(v, wv, bv).reshape(B, S, n_heads, d_k).transpose(0, 2, 1, 3)
    scores = jnp.einsum("bhqd,bhkd->bhqk", Q, K) / scale
    attn = jax.nn.softmax(scores, axis=-1)
    ctx = jnp.einsum("bhqk,bhkd->bhqd", attn, V)
    ctx = ctx.transpose(0, 2, 1, 3).reshape(B, S, D)
    out = ctx @ wo.T + bo[0]
    return out, attn


if __name__ == "__main__":
    B, S, D, H = 2, 8, 32, 8   # d_model=32, n_heads=8 -> d_k=4

    key = jax.random.PRNGKey(0)
    kq, kk, kv, kp = jax.random.split(key, 4)
    q = jax.random.normal(kq, (B, S, D), jnp.float32)
    k = jax.random.normal(kk, (B, S, D), jnp.float32)
    v = jax.random.normal(kv, (B, S, D), jnp.float32)
    params = init_params(kp, D)

    ref_out, ref_attn = reference_mha(q, k, v, params, H)

    out, attn = multi_head_attention(q, k, v, params, H)
    out = jax.block_until_ready(out)
    attn = jax.block_until_ready(attn)

    assert out.shape == (B, S, D) and attn.shape == (B, H, S, S)
    assert jnp.allclose(out, ref_out, atol=1e-3, rtol=1e-3)
    assert jnp.allclose(attn, ref_attn, atol=1e-3, rtol=1e-3)
    # Exact softmax normalization (no approx reciprocal): rows sum to 1.
    assert jnp.allclose(attn.sum(-1), jnp.ones((B, H, S)), atol=1e-5)

    print("KERNEL_OK")
</pallas_src>

<mosaic_0001>
module attributes {stable_mosaic.version = 11 : i64} {
  func.func @mha_kernel(%arg0: i32, %arg1: memref<2x8x96xf32, #tpu.memory_space<vmem>>, %arg2: memref<96x96xf32, #tpu.memory_space<vmem>>, %arg3: memref<1x96xf32, #tpu.memory_space<vmem>>, %arg4: memref<64x32xf32, #tpu.memory_space<vmem>>, %arg5: memref<32x32xf32, #tpu.memory_space<vmem>>, %arg6: memref<1x32xf32, #tpu.memory_space<vmem>>, %arg7: memref<2x8x32xf32, #tpu.memory_space<vmem>>, %arg8: memref<8x128xf32, #tpu.memory_space<vmem>>) attributes {dimension_semantics = [#tpu.dimension_semantics<arbitrary>], iteration_bounds = array<i64: 1>, scalar_prefetch = 0 : i64, scratch_operands = 0 : i64, tpu.core_type = #tpu.core_type<tc>, window_params = [{pipeline_mode = #tpu.pipeline_mode<synchronous>, transform_indices = @transform_0, window_bounds = array<i64: 2, 8, 96>}, {pipeline_mode = #tpu.pipeline_mode<synchronous>, transform_indices = @transform_1, window_bounds = array<i64: 96, 96>}, {pipeline_mode = #tpu.pipeline_mode<synchronous>, transform_indices = @transform_2, window_bounds = array<i64: 1, 96>}, {pipeline_mode = #tpu.pipeline_mode<synchronous>, transform_indices = @transform_3, window_bounds = array<i64: 64, 32>}, {pipeline_mode = #tpu.pipeline_mode<synchronous>, transform_indices = @transform_4, window_bounds = array<i64: 32, 32>}, {pipeline_mode = #tpu.pipeline_mode<synchronous>, transform_indices = @transform_5, window_bounds = array<i64: 1, 32>}, {pipeline_mode = #tpu.pipeline_mode<synchronous>, transform_indices = @transform_6, window_bounds = array<i64: 2, 8, 32>}, {pipeline_mode = #tpu.pipeline_mode<synchronous>, transform_indices = @transform_7, window_bounds = array<i64: 8, 128>}]} {
    %c0 = arith.constant 0 : index
    %c0_0 = arith.constant 0 : index
    %c0_1 = arith.constant 0 : index
    %0 = vector.load %arg1[%c0, %c0_0, %c0_1] : memref<2x8x96xf32, #tpu.memory_space<vmem>>, vector<2x8x96xf32>
    %1 = vector.shape_cast %0 : vector<2x8x96xf32> to vector<16x96xf32>
    %c0_2 = arith.constant 0 : index
    %c0_3 = arith.constant 0 : index
    %2 = vector.load %arg2[%c0_2, %c0_3] : memref<96x96xf32, #tpu.memory_space<vmem>>, vector<96x96xf32>
    %cst = arith.constant dense<0.000000e+00> : vector<16x96xf32>
    %3 = tpu.matmul %1, %2, %cst {dimension_numbers = #tpu.dot_dimension_numbers<[1], [0], [0], [1], [0, 0, 1, 1], [], []>} : vector<16x96xf32>, vector<96x96xf32>, vector<16x96xf32> -> vector<16x96xf32>
    %c0_4 = arith.constant 0 : index
    %c0_5 = arith.constant 0 : index
    %4 = vector.load %arg3[%c0_4, %c0_5] : memref<1x96xf32, #tpu.memory_space<vmem>>, vector<1x96xf32>
    %5 = vector.broadcast %4 : vector<1x96xf32> to vector<16x96xf32>
    %6 = arith.addf %3, %5 : vector<16x96xf32>
    %7 = vector.extract_strided_slice %6 {offsets = [0, 0], sizes = [16, 32], strides = [1, 1]} : vector<16x96xf32> to vector<16x32xf32>
    %8 = vector.extract_strided_slice %6 {offsets = [0, 32], sizes = [16, 32], strides = [1, 1]} : vector<16x96xf32> to vector<16x32xf32>
    %9 = vector.extract_strided_slice %6 {offsets = [0, 64], sizes = [16, 32], strides = [1, 1]} : vector<16x96xf32> to vector<16x32xf32>
    %c0_6 = arith.constant 0 : index
    %c0_7 = arith.constant 0 : index
    %10 = vector.load %arg4[%c0_6, %c0_7] : memref<64x32xf32, #tpu.memory_space<vmem>>, vector<64x32xf32>
    %11 = vector.extract_strided_slice %7 {offsets = [0, 0], sizes = [8, 32], strides = [1, 1]} : vector<16x32xf32> to vector<8x32xf32>
    %12 = vector.extract_strided_slice %8 {offsets = [0, 0], sizes = [8, 32], strides = [1, 1]} : vector<16x32xf32> to vector<8x32xf32>
    %13 = vector.extract_strided_slice %9 {offsets = [0, 0], sizes = [8, 32], strides = [1, 1]} : vector<16x32xf32> to vector<8x32xf32>
    %14 = vector.shape_cast %12 : vector<8x32xf32> to vector<1x8x32xf32>
    %15 = vector.shape_cast %14 : vector<1x8x32xf32> to vector<1x8x32xf32>
    %16 = vector.broadcast %15 : vector<1x8x32xf32> to vector<8x8x32xf32>
    %17 = vector.shape_cast %16 : vector<8x8x32xf32> to vector<64x32xf32>
    %18 = arith.mulf %17, %10 : vector<64x32xf32>
    %19 = vector.shape_cast %13 : vector<8x32xf32> to vector<1x8x32xf32>
    %20 = vector.shape_cast %19 : vector<1x8x32xf32> to vector<1x8x32xf32>
    %21 = vector.broadcast %20 : vector<1x8x32xf32> to vector<8x8x32xf32>
    %22 = vector.shape_cast %21 : vector<8x8x32xf32> to vector<64x32xf32>
    %23 = arith.mulf %22, %10 : vector<64x32xf32>
    %cst_8 = arith.constant dense<0.000000e+00> : vector<8x64xf32>
    %24 = tpu.matmul %11, %18, %cst_8 {dimension_numbers = #tpu.dot_dimension_numbers<[1], [1], [0], [0], [0, 0, 1, 0], [], []>} : vector<8x32xf32>, vector<64x32xf32>, vector<8x64xf32> -> vector<8x64xf32>
    %25 = vector.shape_cast %24 : vector<8x64xf32> to vector<8x8x8xf32>
    %cst_9 = arith.constant dense<0xFF800000> : vector<8x8xf32>
    %26 = vector.multi_reduction <maximumf>, %25, %cst_9 [2] : vector<8x8x8xf32> to vector<8x8xf32>
    %27 = vector.shape_cast %26 : vector<8x8xf32> to vector<8x8x1xf32>
    %28 = vector.broadcast %27 : vector<8x8x1xf32> to vector<8x8x8xf32>
    %29 = arith.subf %25, %28 : vector<8x8x8xf32>
    %30 = math.exp %29 : vector<8x8x8xf32>
    %cst_10 = arith.constant dense<0.000000e+00> : vector<8x8xf32>
    %31 = vector.multi_reduction <add>, %30, %cst_10 [2] : vector<8x8x8xf32> to vector<8x8xf32>
    %32 = vector.shape_cast %31 : vector<8x8xf32> to vector<8x8x1xf32>
    %33 = vector.broadcast %32 : vector<8x8x1xf32> to vector<8x8x8xf32>
    %34 = arith.divf %30, %33 : vector<8x8x8xf32>
    %35 = vector.shape_cast %34 : vector<8x8x8xf32> to vector<8x64xf32>
    %cst_11 = arith.constant dense<0.000000e+00> : vector<8x32xf32>
    %36 = tpu.matmul %35, %23, %cst_11 {dimension_numbers = #tpu.dot_dimension_numbers<[1], [0], [0], [1], [0, 0, 1, 1], [], []>} : vector<8x64xf32>, vector<64x32xf32>, vector<8x32xf32> -> vector<8x32xf32>
    %37 = vector.extract_strided_slice %7 {offsets = [8, 0], sizes = [8, 32], strides = [1, 1]} : vector<16x32xf32> to vector<8x32xf32>
    %38 = vector.extract_strided_slice %8 {offsets = [8, 0], sizes = [8, 32], strides = [1, 1]} : vector<16x32xf32> to vector<8x32xf32>
    %39 = vector.extract_strided_slice %9 {offsets = [8, 0], sizes = [8, 32], strides = [1, 1]} : vector<16x32xf32> to vector<8x32xf32>
    %40 = vector.shape_cast %38 : vector<8x32xf32> to vector<1x8x32xf32>
    %41 = vector.shape_cast %40 : vector<1x8x32xf32> to vector<1x8x32xf32>
    %42 = vector.broadcast %41 : vector<1x8x32xf32> to vector<8x8x32xf32>
    %43 = vector.shape_cast %42 : vector<8x8x32xf32> to vector<64x32xf32>
    %44 = arith.mulf %43, %10 : vector<64x32xf32>
    %45 = vector.shape_cast %39 : vector<8x32xf32> to vector<1x8x32xf32>
    %46 = vector.shape_cast %45 : vector<1x8x32xf32> to vector<1x8x32xf32>
    %47 = vector.broadcast %46 : vector<1x8x32xf32> to vector<8x8x32xf32>
    %48 = vector.shape_cast %47 : vector<8x8x32xf32> to vector<64x32xf32>
    %49 = arith.mulf %48, %10 : vector<64x32xf32>
    %cst_12 = arith.constant dense<0.000000e+00> : vector<8x64xf32>
    %50 = tpu.matmul %37, %44, %cst_12 {dimension_numbers = #tpu.dot_dimension_numbers<[1], [1], [0], [0], [0, 0, 1, 0], [], []>} : vector<8x32xf32>, vector<64x32xf32>, vector<8x64xf32> -> vector<8x64xf32>
    %51 = vector.shape_cast %50 : vector<8x64xf32> to vector<8x8x8xf32>
    %cst_13 = arith.constant dense<0xFF800000> : vector<8x8xf32>
    %52 = vector.multi_reduction <maximumf>, %51, %cst_13 [2] : vector<8x8x8xf32> to vector<8x8xf32>
    %53 = vector.shape_cast %52 : vector<8x8xf32> to vector<8x8x1xf32>
    %54 = vector.broadcast %53 : vector<8x8x1xf32> to vector<8x8x8xf32>
    %55 = arith.subf %51, %54 : vector<8x8x8xf32>
    %56 = math.exp %55 : vector<8x8x8xf32>
    %cst_14 = arith.constant dense<0.000000e+00> : vector<8x8xf32>
    %57 = vector.multi_reduction <add>, %56, %cst_14 [2] : vector<8x8x8xf32> to vector<8x8xf32>
    %58 = vector.shape_cast %57 : vector<8x8xf32> to vector<8x8x1xf32>
    %59 = vector.broadcast %58 : vector<8x8x1xf32> to vector<8x8x8xf32>
    %60 = arith.divf %56, %59 : vector<8x8x8xf32>
    %61 = vector.shape_cast %60 : vector<8x8x8xf32> to vector<8x64xf32>
    %cst_15 = arith.constant dense<0.000000e+00> : vector<8x32xf32>
    %62 = tpu.matmul %61, %49, %cst_15 {dimension_numbers = #tpu.dot_dimension_numbers<[1], [0], [0], [1], [0, 0, 1, 1], [], []>} : vector<8x64xf32>, vector<64x32xf32>, vector<8x32xf32> -> vector<8x32xf32>
    %63 = tpu.concatenate %35, %61 in 1 : vector<8x64xf32>, vector<8x64xf32> -> vector<8x128xf32>
    %c0_16 = arith.constant 0 : index
    %c0_17 = arith.constant 0 : index
    %64 = vector.load %arg8[%c0_16, %c0_17] : memref<8x128xf32, #tpu.memory_space<vmem>>, vector<8x128xf32>
    tpu.vector_store %arg8[%c0_16, %c0_17], %63 {strides = array<i32>} : memref<8x128xf32, #tpu.memory_space<vmem>>, vector<8x128xf32>,
    %65 = tpu.concatenate %36, %62 in 0 : vector<8x32xf32>, vector<8x32xf32> -> vector<16x32xf32>
    %c0_18 = arith.constant 0 : index
    %c0_19 = arith.constant 0 : index
    %66 = vector.load %arg5[%c0_18, %c0_19] : memref<32x32xf32, #tpu.memory_space<vmem>>, vector<32x32xf32>
    %cst_20 = arith.constant dense<0.000000e+00> : vector<16x32xf32>
    %67 = tpu.matmul %65, %66, %cst_20 {dimension_numbers = #tpu.dot_dimension_numbers<[1], [0], [0], [1], [0, 0, 1, 1], [], []>} : vector<16x32xf32>, vector<32x32xf32>, vector<16x32xf32> -> vector<16x32xf32>
    %c0_21 = arith.constant 0 : index
    %c0_22 = arith.constant 0 : index
    %68 = vector.load %arg6[%c0_21, %c0_22] : memref<1x32xf32, #tpu.memory_space<vmem>>, vector<1x32xf32>
    %69 = vector.broadcast %68 : vector<1x32xf32> to vector<16x32xf32>
    %70 = arith.addf %67, %69 : vector<16x32xf32>
    %71 = vector.shape_cast %70 : vector<16x32xf32> to vector<2x8x32xf32>
    %c0_23 = arith.constant 0 : index
    %c0_24 = arith.constant 0 : index
    %c0_25 = arith.constant 0 : index
    %72 = vector.load %arg7[%c0_23, %c0_24, %c0_25] : memref<2x8x32xf32, #tpu.memory_space<vmem>>, vector<2x8x32xf32>
    tpu.vector_store %arg7[%c0_23, %c0_24, %c0_25], %71 {strides = array<i32>} : memref<2x8x32xf32, #tpu.memory_space<vmem>>, vector<2x8x32xf32>,
    return
  }
  func.func @transform_0(%arg0: i32) -> (i32, i32, i32) {
    %c0_i32 = arith.constant 0 : i32
    %c0_i32_0 = arith.constant 0 : i32
    %c0_i32_1 = arith.constant 0 : i32
    %c0_i32_2 = arith.constant 0 : i32
    return %c0_i32, %c0_i32_0, %c0_i32_1 : i32, i32, i32
  }
  func.func @transform_1(%arg0: i32) -> (i32, i32) {
    %c0_i32 = arith.constant 0 : i32
    %c0_i32_0 = arith.constant 0 : i32
    %c0_i32_1 = arith.constant 0 : i32
    return %c0_i32, %c0_i32_0 : i32, i32
  }
  func.func @transform_2(%arg0: i32) -> (i32, i32) {
    %c0_i32 = arith.constant 0 : i32
    %c0_i32_0 = arith.constant 0 : i32
    %c0_i32_1 = arith.constant 0 : i32
    return %c0_i32, %c0_i32_0 : i32, i32
  }
  func.func @transform_3(%arg0: i32) -> (i32, i32) {
    %c0_i32 = arith.constant 0 : i32
    %c0_i32_0 = arith.constant 0 : i32
    %c0_i32_1 = arith.constant 0 : i32
    return %c0_i32, %c0_i32_0 : i32, i32
  }
  func.func @transform_4(%arg0: i32) -> (i32, i32) {
    %c0_i32 = arith.constant 0 : i32
    %c0_i32_0 = arith.constant 0 : i32
    %c0_i32_1 = arith.constant 0 : i32
    return %c0_i32, %c0_i32_0 : i32, i32
  }
  func.func @transform_5(%arg0: i32) -> (i32, i32) {
    %c0_i32 = arith.constant 0 : i32
    %c0_i32_0 = arith.constant 0 : i32
    %c0_i32_1 = arith.constant 0 : i32
    return %c0_i32, %c0_i32_0 : i32, i32
  }
  func.func @transform_6(%arg0: i32) -> (i32, i32, i32) {
    %c0_i32 = arith.constant 0 : i32
    %c0_i32_0 = arith.constant 0 : i32
    %c0_i32_1 = arith.constant 0 : i32
    %c0_i32_2 = arith.constant 0 : i32
    return %c0_i32, %c0_i32_0, %c0_i32_1 : i32, i32, i32
  }
  func.func @transform_7(%arg0: i32) -> (i32, i32) {
    %c0_i32 = arith.constant 0 : i32
    %c0_i32_0 = arith.constant 0 : i32
    %c0_i32_1 = arith.constant 0 : i32
    return %c0_i32, %c0_i32_0 : i32, i32
  }
}

</mosaic_0001>

<llo_original>
// kernel: tpu_custom_call.1
$region0: #{tpu_custom_call.1}
  #allocation0 [shape = 'u32[]', space=smem, size = 0x4, offset = 0x4, fixed_abs, tag = 'smem constant byte address 0x4 - core index']
  #allocation1 [shape = 'u32[144,128]{1,0:T(1,128)}', space=vmem, size = 0x12000, scoped, tag = 'internal scratch']
  %s0 = inlined_call_operand.hbm [shape: f32[2,8,96], index: 0, kind: input, shape index: {}]
  %s1 = inlined_call_operand.vmem [shape: f32[96,96], index: 1, kind: input, shape index: {}]
  %s2 = inlined_call_operand.vmem [shape: f32[1,96], index: 2, kind: input, shape index: {}]
  %s3 = inlined_call_operand.vmem [shape: f32[64,32], index: 3, kind: input, shape index: {}]
  %s4 = inlined_call_operand.hbm [shape: f32[32,32], index: 4, kind: input, shape index: {}]
  %s5 = inlined_call_operand.vmem [shape: f32[1,32], index: 5, kind: input, shape index: {}]
  %s6 = inlined_call_operand.hbm [shape: f32[2,8,32], index: 6, kind: output, shape index: {0}]
  %s7 = inlined_call_operand.hbm [shape: f32[8,128], index: 7, kind: output, shape index: {1}]
  %8 = xla_tuple %s6, %s7
  %s9 = sld [smem:[#allocation0]]
  $region50: #{tpu_custom_call.1} parent=0
    _
  %s11 = ssub.s32 1, %s9
  %s12 = scalar_select 0, %s11, %s9
  $region1: #{tpu_custom_call.1} parent=0
    #allocation2 [shape = 'u8[8192]{0}', space=vmem, size = 0x2000, scoped, tag = 'input window, operand 0, single buffered']
    #allocation3 [shape = 's32[1]{0}', space=sflag, size = 0x4, scoped, tag = 'scoped memory for tpu_custom_call.1']
    #allocation4 [shape = 's32[1]{0}', space=sflag, size = 0x4, scoped, tag = 'scoped memory for tpu_custom_call.1']
    #allocation5 [shape = 'u8[16384]{0}', space=vmem, size = 0x4000, scoped, tag = 'input window, operand 4, single buffered']
    #allocation6 [shape = 's32[1]{0}', space=sflag, size = 0x4, scoped, tag = 'scoped memory for tpu_custom_call.1']
    #allocation7 [shape = 'u8[8192]{0}', space=vmem, size = 0x2000, scoped, tag = 'output window, operand 0, single buffered']
    #allocation8 [shape = 'u8[4096]{0}', space=vmem, size = 0x1000, scoped, tag = 'output window, operand 1, single buffered']
    #allocation9 [shape = 's32[1]{0}', space=sflag, size = 0x4, scoped, tag = 'scoped memory for tpu_custom_call.1']
    %13 = vsyncpa [#allocation3], 0
    %14 = vsyncpa [#allocation6], 0
    %15 = vsyncpa [#allocation4], 0
    %16 = vsyncpa [#allocation9], 0
    // Predicated region
    $region2: #{tpu_custom_call.1} parent=1 // pred_check
      _
    $region3: #{tpu_custom_call.1} parent=1 // pred_check_branch
      %18 = sbr.rel (0) target = $region5
    $region4: #{tpu_custom_call.1} parent=1 // pred_region
      %s20 = ssub.s32 256, 256
      %21 = vsyncadd [#allocation3], %s20
      %s22 = sshll.u32 [#allocation2], 4
      %s23 = int_to_ptr.vmem [resolvable:$true] %s22
      %28 = dma.hbm_to_vmem [thread:$0]  %s0, 256, %s23, [#allocation3], 128, 128, 8
    $region5: #{tpu_custom_call.1} parent=1 // pred_fallthru
      _
    // Predicated region
    $region6: #{tpu_custom_call.1} parent=1 // pred_check
      _
    $region7: #{tpu_custom_call.1} parent=1 // pred_check_branch
      %30 = sbr.rel (0) target = $region9
    $region8: #{tpu_custom_call.1} parent=1 // pred_region
      _
    $region9: #{tpu_custom_call.1} parent=1 // pred_fallthru
      _
    // Predicated region
    $region10: #{tpu_custom_call.1} parent=1 // pred_check
      _
    $region11: #{tpu_custom_call.1} parent=1 // pred_check_branch
      %32 = sbr.rel (0) target = $region13
    $region12: #{tpu_custom_call.1} parent=1 // pred_region
      _
    $region13: #{tpu_custom_call.1} parent=1 // pred_fallthru
      _
    // Predicated region
    $region14: #{tpu_custom_call.1} parent=1 // pred_check
      _
    $region15: #{tpu_custom_call.1} parent=1 // pred_check_branch
      %34 = sbr.rel (0) target = $region17
    $region16: #{tpu_custom_call.1} parent=1 // pred_region
      _
    $region17: #{tpu_custom_call.1} parent=1 // pred_fallthru
      _
    // Predicated region
    $region18: #{tpu_custom_call.1} parent=1 // pred_check
      _
    $region19: #{tpu_custom_call.1} parent=1 // pred_check_branch
      %36 = sbr.rel (0) target = $region21
    $region20: #{tpu_custom_call.1} parent=1 // pred_region
      %s38 = ssub.s32 512, 512
      %39 = vsyncadd [#allocation6], %s38
      %s40 = sshll.u32 [#allocation5], 4
      %s41 = int_to_ptr.vmem [resolvable:$true] %s40
      %46 = dma.hbm_to_vmem [thread:$0]  %s4, 512, %s41, [#allocation6], 128, 128, 8
    $region21: #{tpu_custom_call.1} parent=1 // pred_fallthru
      _
    // Predicated region
    $region22: #{tpu_custom_call.1} parent=1 // pred_check
      _
    $region23: #{tpu_custom_call.1} parent=1 // pred_check_branch
      %48 = sbr.rel (0) target = $region25
    $region24: #{tpu_custom_call.1} parent=1 // pred_region
      _
    $region25: #{tpu_custom_call.1} parent=1 // pred_fallthru
      _
    // Predicated region
    $region26: #{tpu_custom_call.1} parent=1 // pred_check
      _
    $region27: #{tpu_custom_call.1} parent=1 // pred_check_branch
      %50 = sbr.rel (0) target = $region29
    $region28: #{tpu_custom_call.1} parent=1 // pred_region
      %51 = dma.done [#allocation3], 256
    $region29: #{tpu_custom_call.1} parent=1 // pred_fallthru
      _
    // Predicated region
    $region30: #{tpu_custom_call.1} parent=1 // pred_check
      _
    $region31: #{tpu_custom_call.1} parent=1 // pred_check_branch
      %53 = sbr.rel (0) target = $region33
    $region32: #{tpu_custom_call.1} parent=1 // pred_region
      %54 = dma.done [#allocation6], 512
    $region33: #{tpu_custom_call.1} parent=1 // pred_fallthru
      _
    %v55 = vld [vmem:[#allocation2] sm:$0xff]
    %v56 = vld [vmem:[#allocation2 + $0x8] sm:$0xff]
    %v57 = vld [vmem:[%s1] sm:$0xff]
    %v58 = vld [vmem:[%s1 + $0x8] sm:$0xff]
    %v59 = vld [vmem:[%s1 + $0x10] sm:$0xff]
    %v60 = vld [vmem:[%s1 + $0x18] sm:$0xff]
    %v61 = vld [vmem:[%s1 + $0x20] sm:$0xff]
    %v62 = vld [vmem:[%s1 + $0x28] sm:$0xff]
    %v63 = vld [vmem:[%s1 + $0x30] sm:$0xff]
    %v64 = vld [vmem:[%s1 + $0x38] sm:$0xff]
    %v65 = vld [vmem:[%s1 + $0x40] sm:$0xff]
    %v66 = vld [vmem:[%s1 + $0x48] sm:$0xff]
    %v67 = vld [vmem:[%s1 + $0x50] sm:$0xff]
    %v68 = vld [vmem:[%s1 + $0x58] sm:$0xff]
    %v69 = vld [vmem:[%s2] sm:$0x1]
    %v71 = vlaneseq
    %v72 = vshrl.u32 %v71, 7
    %v73 = vsub.s32 0, %v72
    %v74 = vrot.slane %v69, %v73
    %vm76 = vcmask 785408
    %v78 = vsel %vm76, %v55, 0
    %v81 = vsel %vm76, %v56, 0
    %83 = vmatprep.subr.mxu0 0.0
    %84 = vmatpush1.msra.mxu0 0.0
    %85 = vmatprep.subr.mxu0 0.0
    %86 = vmatpush1.msra.mxu0 0.0
    %87 = vmatprep.subr.mxu0 0.0
    %88 = vmatpush1.msra.mxu0 0.0
    %89 = vmatprep.subr.mxu0 0.0
    %90 = vmatpush1.msra.mxu0 0.0
    %91 = vmatprep.subr.mxu0 0.0
    %92 = vmatpush1.msra.mxu0 %v68
    %93 = vmatprep.subr.mxu0 0.0
    %94 = vmatpush1.msra.mxu0 %v67
    %95 = vmatprep.subr.mxu0 0.0
    %96 = vmatpush1.msra.mxu0 %v66
    %97 = vmatprep.subr.mxu0 0.0
    %98 = vmatpush1.msra.mxu0 %v65
    %99 = vmatprep.subr.mxu0 0.0
    %100 = vmatpush1.msra.mxu0 %v64
    %101 = vmatprep.subr.mxu0 0.0
    %102 = vmatpush1.msra.mxu0 %v63
    %103 = vmatprep.subr.mxu0 0.0
    %104 = vmatpush1.msra.mxu0 %v62
    %105 = vmatprep.subr.mxu0 0.0
    %106 = vmatpush1.msra.mxu0 %v61
    %107 = vmatprep.subr.mxu0 0.0
    %108 = vmatpush1.msra.mxu0 %v60
    %109 = vmatprep.subr.mxu0 0.0
    %110 = vmatpush1.msra.mxu0 %v59
    %111 = vmatprep.subr.mxu0 0.0
    %112 = vmatpush1.msra.mxu0 %v58
    %113 = vmatprep.subr.mxu0 0.0
    %114 = vmatpush1.msra.mxu0 %v57
    %115 = vmatprep.subr.mxu0 0.0
    %116 = vmatpush2.msra.mxu0 0.0
    %117 = vmatprep.subr.mxu0 0.0
    %118 = vmatpush2.msra.mxu0 0.0
    %119 = vmatprep.subr.mxu0 0.0
    %120 = vmatpush2.msra.mxu0 0.0
    %121 = vmatprep.subr.mxu0 0.0
    %122 = vmatpush2.msra.mxu0 0.0
    %123 = vmatprep.subr.mxu0 0.0
    %124 = vmatpush2.msra.mxu0 0.0
    %125 = vmatprep.subr.mxu0 0.0
    %126 = vmatpush2.msra.mxu0 0.0
    %127 = vmatprep.subr.mxu0 0.0
    %128 = vmatpush2.msra.mxu0 0.0
    %129 = vmatprep.subr.mxu0 0.0
    %130 = vmatpush2.msra.mxu0 0.0
    %131 = vmatprep.subr.mxu0 0.0
    %132 = vmatpush2.msra.mxu0 0.0
    %133 = vmatprep.subr.mxu0 0.0
    %134 = vmatpush2.msra.mxu0 0.0
    %135 = vmatprep.subr.mxu0 0.0
    %136 = vmatpush2.msra.mxu0 0.0
    %137 = vmatprep.subr.mxu0 0.0
    %138 = vmatpush2.msra.mxu0 0.0
    %139 = vmatprep.subr.mxu0 0.0
    %140 = vmatpush2.msra.mxu0 0.0
    %141 = vmatprep.subr.mxu0 0.0
    %142 = vmatpush2.msra.mxu0 0.0
    %143 = vmatprep.subr.mxu0 0.0
    %144 = vmatpush2.msra.mxu0 0.0
    %145 = vmatprep.subr.mxu0 0.0
    %146 = vmatpush2.msra.mxu0 0.0
    %147 = vmatprep.mubr.f32.mxu0 0.0
    %148 = vmatmul.mubr.f32.gmra.mxu0 %v78
    %v149 = vpop.f32.mrf.mxu0
    %v150 = vadd.f32 %v74, %v149
    %v151 = vpop.f32.mrf.mxu0
    %152 = vmatprep.mubr.f32.mxu0 0.0
    %153 = vmatmul.mubr.f32.gmra.mxu0 %v81
    %v154 = vpop.f32.mrf.mxu0
    %v155 = vadd.f32 %v74, %v154
    %v156 = vpop.f32.mrf.mxu0
    %157 = vdwg.mxu0
    %v158 = vld [vmem:[%s3] sm:$0xff]
    %v159 = vld [vmem:[%s3 + $0x8] sm:$0xff]
    %v160 = vld [vmem:[%s3 + $0x10] sm:$0xff]
    %v161 = vld [vmem:[%s3 + $0x18] sm:$0xff]
    %v162 = vld [vmem:[%s3 + $0x20] sm:$0xff]
    %v163 = vld [vmem:[%s3 + $0x28] sm:$0xff]
    %v164 = vld [vmem:[%s3 + $0x30] sm:$0xff]
    %v165 = vld [vmem:[%s3 + $0x38] sm:$0xff]
    %174 = vrot.lane.b32.xlu0 %v158, 32
    %v175 = vpop.permute.xlu0 %174
    %176 = vrot.lane.b32.xlu0 %v159, 32
    %v177 = vpop.permute.xlu0 %176
    %178 = vrot.lane.b32.xlu0 %v160, 32
    %v179 = vpop.permute.xlu0 %178
    %180 = vrot.lane.b32.xlu0 %v161, 32
    %v181 = vpop.permute.xlu0 %180
    %182 = vrot.lane.b32.xlu0 %v162, 32
    %v183 = vpop.permute.xlu0 %182
    %184 = vrot.lane.b32.xlu0 %v163, 32
    %v185 = vpop.permute.xlu0 %184
    %186 = vrot.lane.b32.xlu0 %v164, 32
    %v187 = vpop.permute.xlu0 %186
    %188 = vrot.lane.b32.xlu0 %v165, 32
    %v189 = vpop.permute.xlu0 %188
    %v198 = vmul.f32 %v150, %v175
    %v199 = vmul.f32 %v150, %v177
    %v200 = vmul.f32 %v150, %v179
    %v201 = vmul.f32 %v150, %v181
    %v202 = vmul.f32 %v150, %v183
    %v203 = vmul.f32 %v150, %v185
    %v204 = vmul.f32 %v150, %v187
    %v205 = vmul.f32 %v150, %v189
    %206 = vrot.lane.b32.xlu0 %v158, 64
    %v207 = vpop.permute.xlu0 %206
    %208 = vrot.lane.b32.xlu0 %v159, 64
    %v209 = vpop.permute.xlu0 %208
    %210 = vrot.lane.b32.xlu0 %v160, 64
    %v211 = vpop.permute.xlu0 %210
    %212 = vrot.lane.b32.xlu0 %v161, 64
    %v213 = vpop.permute.xlu0 %212
    %214 = vrot.lane.b32.xlu0 %v162, 64
    %v215 = vpop.permute.xlu0 %214
    %216 = vrot.lane.b32.xlu0 %v163, 64
    %v217 = vpop.permute.xlu0 %216
    %218 = vrot.lane.b32.xlu0 %v164, 64
    %v219 = vpop.permute.xlu0 %218
    %220 = vrot.lane.b32.xlu0 %v165, 64
    %v221 = vpop.permute.xlu0 %220
    %v230 = vmul.f32 %v150, %v207
    %v231 = vmul.f32 %v150, %v209
    %v232 = vmul.f32 %v150, %v211
    %v233 = vmul.f32 %v150, %v213
    %v234 = vmul.f32 %v150, %v215
    %v235 = vmul.f32 %v150, %v217
    %v236 = vmul.f32 %v150, %v219
    %v237 = vmul.f32 %v150, %v221
    %246 = vrot.lane.b32.xlu0 %v198, 96
    %v247 = vpop.permute.xlu0 %246
    %248 = vrot.lane.b32.xlu0 %v199, 96
    %v249 = vpop.permute.xlu0 %248
    %250 = vrot.lane.b32.xlu0 %v200, 96
    %v251 = vpop.permute.xlu0 %250
    %252 = vrot.lane.b32.xlu0 %v201, 96
    %v253 = vpop.permute.xlu0 %252
    %254 = vrot.lane.b32.xlu0 %v202, 96
    %v255 = vpop.permute.xlu0 %254
    %256 = vrot.lane.b32.xlu0 %v203, 96
    %v257 = vpop.permute.xlu0 %256
    %258 = vrot.lane.b32.xlu0 %v204, 96
    %v259 = vpop.permute.xlu0 %258
    %260 = vrot.lane.b32.xlu0 %v205, 96
    %v261 = vpop.permute.xlu0 %260
    %vm262 = vcmask 261120
    %v264 = vsel %vm262, %v150, 0
    %v266 = vsel %vm262, %v247, 0
    %v268 = vsel %vm262, %v249, 0
    %v270 = vsel %vm262, %v251, 0
    %v272 = vsel %vm262, %v253, 0
    %v274 = vsel %vm262, %v255, 0
    %v276 = vsel %vm262, %v257, 0
    %v278 = vsel %vm262, %v259, 0
    %v280 = vsel %vm262, %v261, 0
    %282 = vmatprep.subr.mxu0 0.0
    %283 = vmatpush1.xpose.msra.mxu0 0.0
    %284 = vmatprep.subr.mxu0 0.0
    %285 = vmatpush1.xpose.msra.mxu0 0.0
    %286 = vmatprep.subr.mxu0 0.0
    %287 = vmatpush1.xpose.msra.mxu0 0.0
    %288 = vmatprep.subr.mxu0 0.0
    %289 = vmatpush1.xpose.msra.mxu0 0.0
    %290 = vmatprep.subr.mxu0 0.0
    %291 = vmatpush1.xpose.msra.mxu0 0.0
    %292 = vmatprep.subr.mxu0 0.0
    %293 = vmatpush1.xpose.msra.mxu0 0.0
    %294 = vmatprep.subr.mxu0 0.0
    %295 = vmatpush1.xpose.msra.mxu0 0.0
    %296 = vmatprep.subr.mxu0 0.0
    %297 = vmatpush1.xpose.msra.mxu0 0.0
    %298 = vmatprep.subr.mxu0 0.0
    %299 = vmatpush1.xpose.msra.mxu0 %v280
    %300 = vmatprep.subr.mxu0 0.0
    %301 = vmatpush1.xpose.msra.mxu0 %v278
    %302 = vmatprep.subr.mxu0 0.0
    %303 = vmatpush1.xpose.msra.mxu0 %v276
    %304 = vmatprep.subr.mxu0 0.0
    %305 = vmatpush1.xpose.msra.mxu0 %v274
    %306 = vmatprep.subr.mxu0 0.0
    %307 = vmatpush1.xpose.msra.mxu0 %v272
    %308 = vmatprep.subr.mxu0 0.0
    %309 = vmatpush1.xpose.msra.mxu0 %v270
    %310 = vmatprep.subr.mxu0 0.0
    %311 = vmatpush1.xpose.msra.mxu0 %v268
    %312 = vmatprep.subr.mxu0 0.0
    %313 = vmatpush1.xpose.msra.mxu0 %v266
    %314 = vmatprep.subr.mxu0 0.0
    %315 = vmatpush2.xpose.msra.mxu0 0.0
    %316 = vmatprep.subr.mxu0 0.0
    %317 = vmatpush2.xpose.msra.mxu0 0.0
    %318 = vmatprep.subr.mxu0 0.0
    %319 = vmatpush2.xpose.msra.mxu0 0.0
    %320 = vmatprep.subr.mxu0 0.0
    %321 = vmatpush2.xpose.msra.mxu0 0.0
    %322 = vmatprep.subr.mxu0 0.0
    %323 = vmatpush2.xpose.msra.mxu0 0.0
    %324 = vmatprep.subr.mxu0 0.0
    %325 = vmatpush2.xpose.msra.mxu0 0.0
    %326 = vmatprep.subr.mxu0 0.0
    %327 = vmatpush2.xpose.msra.mxu0 0.0
    %328 = vmatprep.subr.mxu0 0.0
    %329 = vmatpush2.xpose.msra.mxu0 0.0
    %330 = vmatprep.subr.mxu0 0.0
    %331 = vmatpush2.xpose.msra.mxu0 0.0
    %332 = vmatprep.subr.mxu0 0.0
    %333 = vmatpush2.xpose.msra.mxu0 0.0
    %334 = vmatprep.subr.mxu0 0.0
    %335 = vmatpush2.xpose.msra.mxu0 0.0
    %336 = vmatprep.subr.mxu0 0.0
    %337 = vmatpush2.xpose.msra.mxu0 0.0
    %338 = vmatprep.subr.mxu0 0.0
    %339 = vmatpush2.xpose.msra.mxu0 0.0
    %340 = vmatprep.subr.mxu0 0.0
    %341 = vmatpush2.xpose.msra.mxu0 0.0
    %342 = vmatprep.subr.mxu0 0.0
    %343 = vmatpush2.xpose.msra.mxu0 0.0
    %344 = vmatprep.subr.mxu0 0.0
    %345 = vmatpush2.xpose.msra.mxu0 0.0
    %346 = vmatprep.mubr.f32.mxu0 0.0
    %347 = vmatmul.mubr.f32.gmra.mxu0 %v264
    %v348 = vpop.f32.mrf.mxu0
    %v349 = vadd.f32 0.0, %v348
    %v350 = vpop.f32.mrf.mxu0
    %351 = vdwg.mxu0
    %353 = vrot.lane.b32.xlu0 %v349, 120
    %v354 = vpop.permute.xlu0 %353
    %356 = vrot.lane.b32.xlu0 %v349, 112
    %v357 = vpop.permute.xlu0 %356
    %359 = vrot.lane.b32.xlu0 %v349, 104
    %v360 = vpop.permute.xlu0 %359
    %362 = vrot.lane.b32.xlu0 %v349, 96
    %v363 = vpop.permute.xlu0 %362
    %365 = vrot.lane.b32.xlu0 %v349, 88
    %v366 = vpop.permute.xlu0 %365
    %368 = vrot.lane.b32.xlu0 %v349, 80
    %v369 = vpop.permute.xlu0 %368
    %371 = vrot.lane.b32.xlu0 %v349, 72
    %v372 = vpop.permute.xlu0 %371
    %v374 = vcombine.low %v349, %v357
    %v375 = vcombine.high %v349, %v357
    %v377 = vunpack.c.l.s4 1983009808
    %v378 = vunpack.c.0.s8 %v377
    %v379 = vlaneseq
    %v380 = vshrl.u32 %v379, 7
    %v381 = vsub.s32 %v378, %v380
    %v382 = vrot.slane %v374, %v381
    %v384 = vunpack.c.l.s4 1983009808
    %v385 = vunpack.c.0.s8 %v384
    %v386 = vlaneseq
    %v387 = vshrl.u32 %v386, 7
    %v388 = vsub.s32 %v385, %v387
    %v389 = vrot.slane %v375, %v388
    %v390 = vcombine.low %v354, %v360
    %v391 = vcombine.high %v354, %v360
    %v393 = vunpack.c.l.s4 1983009808
    %v394 = vunpack.c.0.s8 %v393
    %v395 = vlaneseq
    %v396 = vshrl.u32 %v395, 7
    %v397 = vsub.s32 %v394, %v396
    %v398 = vrot.slane %v390, %v397
    %v400 = vunpack.c.l.s4 1983009808
    %v401 = vunpack.c.0.s8 %v400
    %v402 = vlaneseq
    %v403 = vshrl.u32 %v402, 7
    %v404 = vsub.s32 %v401, %v403
    %v405 = vrot.slane %v391, %v404
    %v406 = vcombine.low %v363, %v369
    %v407 = vcombine.high %v363, %v369
    %v409 = vunpack.c.l.s4 1983009808
    %v410 = vunpack.c.0.s8 %v409
    %v411 = vlaneseq
    %v412 = vshrl.u32 %v411, 7
    %v413 = vsub.s32 %v410, %v412
    %v414 = vrot.slane %v406, %v413
    %v416 = vunpack.c.l.s4 1983009808
    %v417 = vunpack.c.0.s8 %v416
    %v418 = vlaneseq
    %v419 = vshrl.u32 %v418, 7
    %v420 = vsub.s32 %v417, %v419
    %v421 = vrot.slane %v407, %v420
    %v422 = vcombine.low %v366, %v372
    %v423 = vcombine.high %v366, %v372
    %v425 = vunpack.c.l.s4 1983009808
    %v426 = vunpack.c.0.s8 %v425
    %v427 = vlaneseq
    %v428 = vshrl.u32 %v427, 7
    %v429 = vsub.s32 %v426, %v428
    %v430 = vrot.slane %v422, %v429
    %v432 = vunpack.c.l.s4 1983009808
    %v433 = vunpack.c.0.s8 %v432
    %v434 = vlaneseq
    %v435 = vshrl.u32 %v434, 7
    %v436 = vsub.s32 %v433, %v435
    %v437 = vrot.slane %v423, %v436
    %v438 = vcombine.low %v382, %v398
    %v439 = vcombine.high %v382, %v398
    %v441 = vunpack.c.l.s4 1934713408
    %v442 = vunpack.c.0.s8 %v441
    %v443 = vlaneseq
    %v444 = vshrl.u32 %v443, 7
    %v445 = vsub.s32 %v442, %v444
    %v446 = vrot.slane %v438, %v445
    %v448 = vunpack.c.l.s4 1934713408
    %v449 = vunpack.c.0.s8 %v448
    %v450 = vlaneseq
    %v451 = vshrl.u32 %v450, 7
    %v452 = vsub.s32 %v449, %v451
    %v453 = vrot.slane %v439, %v452
    %v454 = vcombine.low %v389, %v405
    %v455 = vcombine.high %v389, %v405
    %v457 = vunpack.c.l.s4 1934713408
    %v458 = vunpack.c.0.s8 %v457
    %v459 = vlaneseq
    %v460 = vshrl.u32 %v459, 7
    %v461 = vsub.s32 %v458, %v460
    %v462 = vrot.slane %v454, %v461
    %v464 = vunpack.c.l.s4 1934713408
    %v465 = vunpack.c.0.s8 %v464
    %v466 = vlaneseq
    %v467 = vshrl.u32 %v466, 7
    %v468 = vsub.s32 %v465, %v467
    %v469 = vrot.slane %v455, %v468
    %v470 = vcombine.low %v414, %v430
    %v471 = vcombine.high %v414, %v430
    %v473 = vunpack.c.l.s4 1934713408
    %v474 = vunpack.c.0.s8 %v473
    %v475 = vlaneseq
    %v476 = vshrl.u32 %v475, 7
    %v477 = vsub.s32 %v474, %v476
    %v478 = vrot.slane %v470, %v477
    %v480 = vunpack.c.l.s4 1934713408
    %v481 = vunpack.c.0.s8 %v480
    %v482 = vlaneseq
    %v483 = vshrl.u32 %v482, 7
    %v484 = vsub.s32 %v481, %v483
    %v485 = vrot.slane %v471, %v484
    %v486 = vcombine.low %v421, %v437
    %v487 = vcombine.high %v421, %v437
    %v489 = vunpack.c.l.s4 1934713408
    %v490 = vunpack.c.0.s8 %v489
    %v491 = vlaneseq
    %v492 = vshrl.u32 %v491, 7
    %v493 = vsub.s32 %v490, %v492
    %v494 = vrot.slane %v486, %v493
    %v496 = vunpack.c.l.s4 1934713408
    %v497 = vunpack.c.0.s8 %v496
    %v498 = vlaneseq
    %v499 = vshrl.u32 %v498, 7
    %v500 = vsub.s32 %v497, %v499
    %v501 = vrot.slane %v487, %v500
    %v502 = vcombine.low %v446, %v478
    %v503 = vcombine.high %v446, %v478
    %v504 = vcombine.low %v453, %v485
    %v505 = vcombine.high %v453, %v485
    %v506 = vcombine.low %v462, %v494
    %v507 = vcombine.high %v462, %v494
    %v508 = vcombine.low %v469, %v501
    %v509 = vcombine.high %v469, %v501
    %vm510 = vcmask 64512
    %v511 = vsel %vm510, %v502, -inf
    %512 = vmax.xlane.f32.xlu0 %v511
    %v513 = vpop.xlane.xlu0 %512
    %v514 = vsel %vm510, %v503, -inf
    %515 = vmax.xlane.f32.xlu0 %v514
    %v516 = vpop.xlane.xlu0 %515
    %v517 = vsel %vm510, %v504, -inf
    %518 = vmax.xlane.f32.xlu0 %v517
    %v519 = vpop.xlane.xlu0 %518
    %v520 = vsel %vm510, %v505, -inf
    %521 = vmax.xlane.f32.xlu0 %v520
    %v522 = vpop.xlane.xlu0 %521
    %v523 = vsel %vm510, %v506, -inf
    %524 = vmax.xlane.f32.xlu0 %v523
    %v525 = vpop.xlane.xlu0 %524
    %v526 = vsel %vm510, %v507, -inf
    %527 = vmax.xlane.f32.xlu0 %v526
    %v528 = vpop.xlane.xlu0 %527
    %v529 = vsel %vm510, %v508, -inf
    %530 = vmax.xlane.f32.xlu0 %v529
    %v531 = vpop.xlane.xlu0 %530
    %v532 = vsel %vm510, %v509, -inf
    %533 = vmax.xlane.f32.xlu0 %v532
    %v534 = vpop.xlane.xlu0 %533
    %v535 = vsub.f32 %v502, %v513
    %v536 = vsub.f32 %v503, %v516
    %v537 = vsub.f32 %v504, %v519
    %v538 = vsub.f32 %v505, %v522
    %v539 = vsub.f32 %v506, %v525
    %v540 = vsub.f32 %v507, %v528
    %v541 = vsub.f32 %v508, %v531
    %v542 = vsub.f32 %v509, %v534
    %v543 = vmul.f32 %v535, 1.442695
    %v544 = vpow.pop %v543
    %v545 = vmul.f32 %v536, 1.442695
    %v546 = vpow.pop %v545
    %v547 = vmul.f32 %v537, 1.442695
    %v548 = vpow.pop %v547
    %v549 = vmul.f32 %v538, 1.442695
    %v550 = vpow.pop %v549
    %v551 = vmul.f32 %v539, 1.442695
    %v552 = vpow.pop %v551
    %v553 = vmul.f32 %v540, 1.442695
    %v554 = vpow.pop %v553
    %v555 = vmul.f32 %v541, 1.442695
    %v556 = vpow.pop %v555
    %v557 = vmul.f32 %v542, 1.442695
    %v558 = vpow.pop %v557
    %v559 = vsel %vm510, %v544, 0.0
    %560 = vadd.xlane.f32.xlu0 %v559
    %v561 = vpop.xlane.xlu0 %560
    %v562 = vsel %vm510, %v546, 0.0
    %563 = vadd.xlane.f32.xlu0 %v562
    %v564 = vpop.xlane.xlu0 %563
    %v565 = vsel %vm510, %v548, 0.0
    %566 = vadd.xlane.f32.xlu0 %v565
    %v567 = vpop.xlane.xlu0 %566
    %v568 = vsel %vm510, %v550, 0.0
    %569 = vadd.xlane.f32.xlu0 %v568
    %v570 = vpop.xlane.xlu0 %569
    %v571 = vsel %vm510, %v552, 0.0
    %572 = vadd.xlane.f32.xlu0 %v571
    %v573 = vpop.xlane.xlu0 %572
    %v574 = vsel %vm510, %v554, 0.0
    %575 = vadd.xlane.f32.xlu0 %v574
    %v576 = vpop.xlane.xlu0 %575
    %v577 = vsel %vm510, %v556, 0.0
    %578 = vadd.xlane.f32.xlu0 %v577
    %v579 = vpop.xlane.xlu0 %578
    %v580 = vsel %vm510, %v558, 0.0
    %581 = vadd.xlane.f32.xlu0 %v580
    %v582 = vpop.xlane.xlu0 %581
    %v583 = vrcp.pop %v561
    %v584 = vmul.f32 %v544, %v583
    %v585 = vrcp.pop %v564
    %v586 = vmul.f32 %v546, %v585
    %v587 = vrcp.pop %v567
    %v588 = vmul.f32 %v548, %v587
    %v589 = vrcp.pop %v570
    %v590 = vmul.f32 %v550, %v589
    %v591 = vrcp.pop %v573
    %v592 = vmul.f32 %v552, %v591
    %v593 = vrcp.pop %v576
    %v594 = vmul.f32 %v554, %v593
    %v595 = vrcp.pop %v579
    %v596 = vmul.f32 %v556, %v595
    %v597 = vrcp.pop %v582
    %v598 = vmul.f32 %v558, %v597
    %v599 = vcombine.low %v584, %v588
    %v600 = vcombine.high %v584, %v588
    %v602 = vunpack.c.l.s4 1983009808
    %v603 = vunpack.c.0.s8 %v602
    %v604 = vlaneseq
    %v605 = vshrl.u32 %v604, 7
    %v606 = vsub.s32 %v603, %v605
    %v607 = vrot.slane %v599, %v606
    %v609 = vunpack.c.l.s4 1983009808
    %v610 = vunpack.c.0.s8 %v609
    %v611 = vlaneseq
    %v612 = vshrl.u32 %v611, 7
    %v613 = vsub.s32 %v610, %v612
    %v614 = vrot.slane %v600, %v613
    %v615 = vcombine.low %v586, %v590
    %v616 = vcombine.high %v586, %v590
    %v618 = vunpack.c.l.s4 1983009808
    %v619 = vunpack.c.0.s8 %v618
    %v620 = vlaneseq
    %v621 = vshrl.u32 %v620, 7
    %v622 = vsub.s32 %v619, %v621
    %v623 = vrot.slane %v615, %v622
    %v625 = vunpack.c.l.s4 1983009808
    %v626 = vunpack.c.0.s8 %v625
    %v627 = vlaneseq
    %v628 = vshrl.u32 %v627, 7
    %v629 = vsub.s32 %v626, %v628
    %v630 = vrot.slane %v616, %v629
    %v631 = vcombine.low %v592, %v596
    %v632 = vcombine.high %v592, %v596
    %v634 = vunpack.c.l.s4 1983009808
    %v635 = vunpack.c.0.s8 %v634
    %v636 = vlaneseq
    %v637 = vshrl.u32 %v636, 7
    %v638 = vsub.s32 %v635, %v637
    %v639 = vrot.slane %v631, %v638
    %v641 = vunpack.c.l.s4 1983009808
    %v642 = vunpack.c.0.s8 %v641
    %v643 = vlaneseq
    %v644 = vshrl.u32 %v643, 7
    %v645 = vsub.s32 %v642, %v644
    %v646 = vrot.slane %v632, %v645
    %v647 = vcombine.low %v594, %v598
    %v648 = vcombine.high %v594, %v598
    %v650 = vunpack.c.l.s4 1983009808
    %v651 = vunpack.c.0.s8 %v650
    %v652 = vlaneseq
    %v653 = vshrl.u32 %v652, 7
    %v654 = vsub.s32 %v651, %v653
    %v655 = vrot.slane %v647, %v654
    %v657 = vunpack.c.l.s4 1983009808
    %v658 = vunpack.c.0.s8 %v657
    %v659 = vlaneseq
    %v660 = vshrl.u32 %v659, 7
    %v661 = vsub.s32 %v658, %v660
    %v662 = vrot.slane %v648, %v661
    %v663 = vcombine.low %v607, %v623
    %v664 = vcombine.high %v607, %v623
    %v666 = vunpack.c.l.s4 1934713408
    %v667 = vunpack.c.0.s8 %v666
    %v668 = vlaneseq
    %v669 = vshrl.u32 %v668, 7
    %v670 = vsub.s32 %v667, %v669
    %v671 = vrot.slane %v663, %v670
    %v673 = vunpack.c.l.s4 1934713408
    %v674 = vunpack.c.0.s8 %v673
    %v675 = vlaneseq
    %v676 = vshrl.u32 %v675, 7
    %v677 = vsub.s32 %v674, %v676
    %v678 = vrot.slane %v664, %v677
    %v679 = vcombine.low %v614, %v630
    %v680 = vcombine.high %v614, %v630
    %v682 = vunpack.c.l.s4 1934713408
    %v683 = vunpack.c.0.s8 %v682
    %v684 = vlaneseq
    %v685 = vshrl.u32 %v684, 7
    %v686 = vsub.s32 %v683, %v685
    %v687 = vrot.slane %v679, %v686
    %v689 = vunpack.c.l.s4 1934713408
    %v690 = vunpack.c.0.s8 %v689
    %v691 = vlaneseq
    %v692 = vshrl.u32 %v691, 7
    %v693 = vsub.s32 %v690, %v692
    %v694 = vrot.slane %v680, %v693
    %v695 = vcombine.low %v639, %v655
    %v696 = vcombine.high %v639, %v655
    %v698 = vunpack.c.l.s4 1934713408
    %v699 = vunpack.c.0.s8 %v698
    %v700 = vlaneseq
    %v701 = vshrl.u32 %v700, 7
    %v702 = vsub.s32 %v699, %v701
    %v703 = vrot.slane %v695, %v702
    %v705 = vunpack.c.l.s4 1934713408
    %v706 = vunpack.c.0.s8 %v705
    %v707 = vlaneseq
    %v708 = vshrl.u32 %v707, 7
    %v709 = vsub.s32 %v706, %v708
    %v710 = vrot.slane %v696, %v709
    %v711 = vcombine.low %v646, %v662
    %v712 = vcombine.high %v646, %v662
    %v714 = vunpack.c.l.s4 1934713408
    %v715 = vunpack.c.0.s8 %v714
    %v716 = vlaneseq
    %v717 = vshrl.u32 %v716, 7
    %v718 = vsub.s32 %v715, %v717
    %v719 = vrot.slane %v711, %v718
    %v721 = vunpack.c.l.s4 1934713408
    %v722 = vunpack.c.0.s8 %v721
    %v723 = vlaneseq
    %v724 = vshrl.u32 %v723, 7
    %v725 = vsub.s32 %v722, %v724
    %v726 = vrot.slane %v712, %v725
    %v727 = vcombine.low %v671, %v703
    %v728 = vcombine.high %v671, %v703
    %v729 = vcombine.low %v678, %v710
    %v730 = vcombine.high %v678, %v710
    %v731 = vcombine.low %v687, %v719
    %v732 = vcombine.high %v687, %v719
    %v733 = vcombine.low %v694, %v726
    %v734 = vcombine.high %v694, %v726
    %736 = vrot.lane.b32.xlu0 %v728, 8
    %v737 = vpop.permute.xlu0 %736
    %740 = vrot.lane.b32.xlu0 %v729, 16
    %v741 = vpop.permute.xlu0 %740
    %744 = vrot.lane.b32.xlu0 %v730, 24
    %v745 = vpop.permute.xlu0 %744
    %748 = vrot.lane.b32.xlu0 %v731, 32
    %v749 = vpop.permute.xlu0 %748
    %752 = vrot.lane.b32.xlu0 %v732, 40
    %v753 = vpop.permute.xlu0 %752
    %756 = vrot.lane.b32.xlu0 %v733, 48
    %v757 = vpop.permute.xlu0 %756
    %760 = vrot.lane.b32.xlu0 %v734, 56
    %v761 = vpop.permute.xlu0 %760
    %v763 = vsel %vm510, %v727, %v737
    %vm764 = vcmask 130048
    %v765 = vsel %vm764, %v763, %v741
    %vm766 = vcmask 195584
    %v767 = vsel %vm766, %v765, %v745
    %v768 = vsel %vm262, %v767, %v749
    %vm769 = vcmask 326656
    %v770 = vsel %vm769, %v768, %v753
    %vm771 = vcmask 392192
    %v772 = vsel %vm771, %v770, %v757
    %vm773 = vcmask 457728
    %v774 = vsel %vm773, %v772, %v761
    %783 = vrot.lane.b32.xlu0 %v230, 64
    %v784 = vpop.permute.xlu0 %783
    %785 = vrot.lane.b32.xlu0 %v231, 64
    %v786 = vpop.permute.xlu0 %785
    %787 = vrot.lane.b32.xlu0 %v232, 64
    %v788 = vpop.permute.xlu0 %787
    %789 = vrot.lane.b32.xlu0 %v233, 64
    %v790 = vpop.permute.xlu0 %789
    %791 = vrot.lane.b32.xlu0 %v234, 64
    %v792 = vpop.permute.xlu0 %791
    %793 = vrot.lane.b32.xlu0 %v235, 64
    %v794 = vpop.permute.xlu0 %793
    %795 = vrot.lane.b32.xlu0 %v236, 64
    %v796 = vpop.permute.xlu0 %795
    %797 = vrot.lane.b32.xlu0 %v237, 64
    %v798 = vpop.permute.xlu0 %797
    %vm807 = vcmask 523264
    %v809 = vsel %vm807, %v774, 0
    %811 = vmatprep.subr.mxu0 0.0
    %812 = vmatpush1.msra.mxu0 0.0
    %813 = vmatprep.subr.mxu0 0.0
    %814 = vmatpush1.msra.mxu0 0.0
    %815 = vmatprep.subr.mxu0 0.0
    %816 = vmatpush1.msra.mxu0 0.0
    %817 = vmatprep.subr.mxu0 0.0
    %818 = vmatpush1.msra.mxu0 0.0
    %819 = vmatprep.subr.mxu0 0.0
    %820 = vmatpush1.msra.mxu0 0.0
    %821 = vmatprep.subr.mxu0 0.0
    %822 = vmatpush1.msra.mxu0 0.0
    %823 = vmatprep.subr.mxu0 0.0
    %824 = vmatpush1.msra.mxu0 0.0
    %825 = vmatprep.subr.mxu0 0.0
    %826 = vmatpush1.msra.mxu0 0.0
    %827 = vmatprep.subr.mxu0 0.0
    %828 = vmatpush1.msra.mxu0 %v798
    %829 = vmatprep.subr.mxu0 0.0
    %830 = vmatpush1.msra.mxu0 %v796
    %831 = vmatprep.subr.mxu0 0.0
    %832 = vmatpush1.msra.mxu0 %v794
    %833 = vmatprep.subr.mxu0 0.0
    %834 = vmatpush1.msra.mxu0 %v792
    %835 = vmatprep.subr.mxu0 0.0
    %836 = vmatpush1.msra.mxu0 %v790
    %837 = vmatprep.subr.mxu0 0.0
    %838 = vmatpush1.msra.mxu0 %v788
    %839 = vmatprep.subr.mxu0 0.0
    %840 = vmatpush1.msra.mxu0 %v786
    %841 = vmatprep.subr.mxu0 0.0
    %842 = vmatpush1.msra.mxu0 %v784
    %843 = vmatprep.subr.mxu0 0.0
    %844 = vmatpush2.msra.mxu0 0.0
    %845 = vmatprep.subr.mxu0 0.0
    %846 = vmatpush2.msra.mxu0 0.0
    %847 = vmatprep.subr.mxu0 0.0
    %848 = vmatpush2.msra.mxu0 0.0
    %849 = vmatprep.subr.mxu0 0.0
    %850 = vmatpush2.msra.mxu0 0.0
    %851 = vmatprep.subr.mxu0 0.0
    %852 = vmatpush2.msra.mxu0 0.0
    %853 = vmatprep.subr.mxu0 0.0
    %854 = vmatpush2.msra.mxu0 0.0
    %855 = vmatprep.subr.mxu0 0.0
    %856 = vmatpush2.msra.mxu0 0.0
    %857 = vmatprep.subr.mxu0 0.0
    %858 = vmatpush2.msra.mxu0 0.0
    %859 = vmatprep.subr.mxu0 0.0
    %860 = vmatpush2.msra.mxu0 0.0
    %861 = vmatprep.subr.mxu0 0.0
    %862 = vmatpush2.msra.mxu0 0.0
    %863 = vmatprep.subr.mxu0 0.0
    %864 = vmatpush2.msra.mxu0 0.0
    %865 = vmatprep.subr.mxu0 0.0
    %866 = vmatpush2.msra.mxu0 0.0
    %867 = vmatprep.subr.mxu0 0.0
    %868 = vmatpush2.msra.mxu0 0.0
    %869 = vmatprep.subr.mxu0 0.0
    %870 = vmatpush2.msra.mxu0 0.0
    %871 = vmatprep.subr.mxu0 0.0
    %872 = vmatpush2.msra.mxu0 0.0
    %873 = vmatprep.subr.mxu0 0.0
    %874 = vmatpush2.msra.mxu0 0.0
    %875 = vmatprep.mubr.f32.mxu0 0.0
    %876 = vmatmul.mubr.f32.gmra.mxu0 %v809
    %v877 = vpop.f32.mrf.mxu0
    %v878 = vadd.f32 0.0, %v877
    %v879 = vpop.f32.mrf.mxu0
    %880 = vdwg.mxu0
    %v881 = vmul.f32 %v155, %v175
    %v882 = vmul.f32 %v155, %v177
    %v883 = vmul.f32 %v155, %v179
    %v884 = vmul.f32 %v155, %v181
    %v885 = vmul.f32 %v155, %v183
    %v886 = vmul.f32 %v155, %v185
    %v887 = vmul.f32 %v155, %v187
    %v888 = vmul.f32 %v155, %v189
    %v889 = vmul.f32 %v155, %v207
    %v890 = vmul.f32 %v155, %v209
    %v891 = vmul.f32 %v155, %v211
    %v892 = vmul.f32 %v155, %v213
    %v893 = vmul.f32 %v155, %v215
    %v894 = vmul.f32 %v155, %v217
    %v895 = vmul.f32 %v155, %v219
    %v896 = vmul.f32 %v155, %v221
    %905 = vrot.lane.b32.xlu0 %v881, 96
    %v906 = vpop.permute.xlu0 %905
    %907 = vrot.lane.b32.xlu0 %v882, 96
    %v908 = vpop.permute.xlu0 %907
    %909 = vrot.lane.b32.xlu0 %v883, 96
    %v910 = vpop.permute.xlu0 %909
    %911 = vrot.lane.b32.xlu0 %v884, 96
    %v912 = vpop.permute.xlu0 %911
    %913 = vrot.lane.b32.xlu0 %v885, 96
    %v914 = vpop.permute.xlu0 %913
    %915 = vrot.lane.b32.xlu0 %v886, 96
    %v916 = vpop.permute.xlu0 %915
    %917 = vrot.lane.b32.xlu0 %v887, 96
    %v918 = vpop.permute.xlu0 %917
    %919 = vrot.lane.b32.xlu0 %v888, 96
    %v920 = vpop.permute.xlu0 %919
    %v922 = vsel %vm262, %v155, 0
    %v924 = vsel %vm262, %v906, 0
    %v926 = vsel %vm262, %v908, 0
    %v928 = vsel %vm262, %v910, 0
    %v930 = vsel %vm262, %v912, 0
    %v932 = vsel %vm262, %v914, 0
    %v934 = vsel %vm262, %v916, 0
    %v936 = vsel %vm262, %v918, 0
    %v938 = vsel %vm262, %v920, 0
    %940 = vmatprep.subr.mxu0 0.0
    %941 = vmatpush1.xpose.msra.mxu0 0.0
    %942 = vmatprep.subr.mxu0 0.0
    %943 = vmatpush1.xpose.msra.mxu0 0.0
    %944 = vmatprep.subr.mxu0 0.0
    %945 = vmatpush1.xpose.msra.mxu0 0.0
    %946 = vmatprep.subr.mxu0 0.0
    %947 = vmatpush1.xpose.msra.mxu0 0.0
    %948 = vmatprep.subr.mxu0 0.0
    %949 = vmatpush1.xpose.msra.mxu0 0.0
    %950 = vmatprep.subr.mxu0 0.0
    %951 = vmatpush1.xpose.msra.mxu0 0.0
    %952 = vmatprep.subr.mxu0 0.0
    %953 = vmatpush1.xpose.msra.mxu0 0.0
    %954 = vmatprep.subr.mxu0 0.0
    %955 = vmatpush1.xpose.msra.mxu0 0.0
    %956 = vmatprep.subr.mxu0 0.0
    %957 = vmatpush1.xpose.msra.mxu0 %v938
    %958 = vmatprep.subr.mxu0 0.0
    %959 = vmatpush1.xpose.msra.mxu0 %v936
    %960 = vmatprep.subr.mxu0 0.0
    %961 = vmatpush1.xpose.msra.mxu0 %v934
    %962 = vmatprep.subr.mxu0 0.0
    %963 = vmatpush1.xpose.msra.mxu0 %v932
    %964 = vmatprep.subr.mxu0 0.0
    %965 = vmatpush1.xpose.msra.mxu0 %v930
    %966 = vmatprep.subr.mxu0 0.0
    %967 = vmatpush1.xpose.msra.mxu0 %v928
    %968 = vmatprep.subr.mxu0 0.0
    %969 = vmatpush1.xpose.msra.mxu0 %v926
    %970 = vmatprep.subr.mxu0 0.0
    %971 = vmatpush1.xpose.msra.mxu0 %v924
    %972 = vmatprep.subr.mxu0 0.0
    %973 = vmatpush2.xpose.msra.mxu0 0.0
    %974 = vmatprep.subr.mxu0 0.0
    %975 = vmatpush2.xpose.msra.mxu0 0.0
    %976 = vmatprep.subr.mxu0 0.0
    %977 = vmatpush2.xpose.msra.mxu0 0.0
    %978 = vmatprep.subr.mxu0 0.0
    %979 = vmatpush2.xpose.msra.mxu0 0.0
    %980 = vmatprep.subr.mxu0 0.0
    %981 = vmatpush2.xpose.msra.mxu0 0.0
    %982 = vmatprep.subr.mxu0 0.0
    %983 = vmatpush2.xpose.msra.mxu0 0.0
    %984 = vmatprep.subr.mxu0 0.0
    %985 = vmatpush2.xpose.msra.mxu0 0.0
    %986 = vmatprep.subr.mxu0 0.0
    %987 = vmatpush2.xpose.msra.mxu0 0.0
    %988 = vmatprep.subr.mxu0 0.0
    %989 = vmatpush2.xpose.msra.mxu0 0.0
    %990 = vmatprep.subr.mxu0 0.0
    %991 = vmatpush2.xpose.msra.mxu0 0.0
    %992 = vmatprep.subr.mxu0 0.0
    %993 = vmatpush2.xpose.msra.mxu0 0.0
    %994 = vmatprep.subr.mxu0 0.0
    %995 = vmatpush2.xpose.msra.mxu0 0.0
    %996 = vmatprep.subr.mxu0 0.0
    %997 = vmatpush2.xpose.msra.mxu0 0.0
    %998 = vmatprep.subr.mxu0 0.0
    %999 = vmatpush2.xpose.msra.mxu0 0.0
    %1000 = vmatprep.subr.mxu0 0.0
    %1001 = vmatpush2.xpose.msra.mxu0 0.0
    %1002 = vmatprep.subr.mxu0 0.0
    %1003 = vmatpush2.xpose.msra.mxu0 0.0
    %1004 = vmatprep.mubr.f32.mxu0 0.0
    %1005 = vmatmul.mubr.f32.gmra.mxu0 %v922
    %v1006 = vpop.f32.mrf.mxu0
    %v1007 = vadd.f32 0.0, %v1006
    %v1008 = vpop.f32.mrf.mxu0
    %1009 = vdwg.mxu0
    %1011 = vrot.lane.b32.xlu0 %v1007, 120
    %v1012 = vpop.permute.xlu0 %1011
    %1014 = vrot.lane.b32.xlu0 %v1007, 112
    %v1015 = vpop.permute.xlu0 %1014
    %1017 = vrot.lane.b32.xlu0 %v1007, 104
    %v1018 = vpop.permute.xlu0 %1017
    %1020 = vrot.lane.b32.xlu0 %v1007, 96
    %v1021 = vpop.permute.xlu0 %1020
    %1023 = vrot.lane.b32.xlu0 %v1007, 88
    %v1024 = vpop.permute.xlu0 %1023
    %1026 = vrot.lane.b32.xlu0 %v1007, 80
    %v1027 = vpop.permute.xlu0 %1026
    %1029 = vrot.lane.b32.xlu0 %v1007, 72
    %v1030 = vpop.permute.xlu0 %1029
    %v1032 = vcombine.low %v1007, %v1015
    %v1033 = vcombine.high %v1007, %v1015
    %v1035 = vunpack.c.l.s4 1983009808
    %v1036 = vunpack.c.0.s8 %v1035
    %v1037 = vlaneseq
    %v1038 = vshrl.u32 %v1037, 7
    %v1039 = vsub.s32 %v1036, %v1038
    %v1040 = vrot.slane %v1032, %v1039
    %v1042 = vunpack.c.l.s4 1983009808
    %v1043 = vunpack.c.0.s8 %v1042
    %v1044 = vlaneseq
    %v1045 = vshrl.u32 %v1044, 7
    %v1046 = vsub.s32 %v1043, %v1045
    %v1047 = vrot.slane %v1033, %v1046
    %v1048 = vcombine.low %v1012, %v1018
    %v1049 = vcombine.high %v1012, %v1018
    %v1051 = vunpack.c.l.s4 1983009808
    %v1052 = vunpack.c.0.s8 %v1051
    %v1053 = vlaneseq
    %v1054 = vshrl.u32 %v1053, 7
    %v1055 = vsub.s32 %v1052, %v1054
    %v1056 = vrot.slane %v1048, %v1055
    %v1058 = vunpack.c.l.s4 1983009808
    %v1059 = vunpack.c.0.s8 %v1058
    %v1060 = vlaneseq
    %v1061 = vshrl.u32 %v1060, 7
    %v1062 = vsub.s32 %v1059, %v1061
    %v1063 = vrot.slane %v1049, %v1062
    %v1064 = vcombine.low %v1021, %v1027
    %v1065 = vcombine.high %v1021, %v1027
    %v1067 = vunpack.c.l.s4 1983009808
    %v1068 = vunpack.c.0.s8 %v1067
    %v1069 = vlaneseq
    %v1070 = vshrl.u32 %v1069, 7
    %v1071 = vsub.s32 %v1068, %v1070
    %v1072 = vrot.slane %v1064, %v1071
    %v1074 = vunpack.c.l.s4 1983009808
    %v1075 = vunpack.c.0.s8 %v1074
    %v1076 = vlaneseq
    %v1077 = vshrl.u32 %v1076, 7
    %v1078 = vsub.s32 %v1075, %v1077
    %v1079 = vrot.slane %v1065, %v1078
    %v1080 = vcombine.low %v1024, %v1030
    %v1081 = vcombine.high %v1024, %v1030
    %v1083 = vunpack.c.l.s4 1983009808
    %v1084 = vunpack.c.0.s8 %v1083
    %v1085 = vlaneseq
    %v1086 = vshrl.u32 %v1085, 7
    %v1087 = vsub.s32 %v1084, %v1086
    %v1088 = vrot.slane %v1080, %v1087
    %v1090 = vunpack.c.l.s4 1983009808
    %v1091 = vunpack.c.0.s8 %v1090
    %v1092 = vlaneseq
    %v1093 = vshrl.u32 %v1092, 7
    %v1094 = vsub.s32 %v1091, %v1093
    %v1095 = vrot.slane %v1081, %v1094
    %v1096 = vcombine.low %v1040, %v1056
    %v1097 = vcombine.high %v1040, %v1056
    %v1099 = vunpack.c.l.s4 1934713408
    %v1100 = vunpack.c.0.s8 %v1099
    %v1101 = vlaneseq
    %v1102 = vshrl.u32 %v1101, 7
    %v1103 = vsub.s32 %v1100, %v1102
    %v1104 = vrot.slane %v1096, %v1103
    %v1106 = vunpack.c.l.s4 1934713408
    %v1107 = vunpack.c.0.s8 %v1106
    %v1108 = vlaneseq
    %v1109 = vshrl.u32 %v1108, 7
    %v1110 = vsub.s32 %v1107, %v1109
    %v1111 = vrot.slane %v1097, %v1110
    %v1112 = vcombine.low %v1047, %v1063
    %v1113 = vcombine.high %v1047, %v1063
    %v1115 = vunpack.c.l.s4 1934713408
    %v1116 = vunpack.c.0.s8 %v1115
    %v1117 = vlaneseq
    %v1118 = vshrl.u32 %v1117, 7
    %v1119 = vsub.s32 %v1116, %v1118
    %v1120 = vrot.slane %v1112, %v1119
    %v1122 = vunpack.c.l.s4 1934713408
    %v1123 = vunpack.c.0.s8 %v1122
    %v1124 = vlaneseq
    %v1125 = vshrl.u32 %v1124, 7
    %v1126 = vsub.s32 %v1123, %v1125
    %v1127 = vrot.slane %v1113, %v1126
    %v1128 = vcombine.low %v1072, %v1088
    %v1129 = vcombine.high %v1072, %v1088
    %v1131 = vunpack.c.l.s4 1934713408
    %v1132 = vunpack.c.0.s8 %v1131
    %v1133 = vlaneseq
    %v1134 = vshrl.u32 %v1133, 7
    %v1135 = vsub.s32 %v1132, %v1134
    %v1136 = vrot.slane %v1128, %v1135
    %v1138 = vunpack.c.l.s4 1934713408
    %v1139 = vunpack.c.0.s8 %v1138
    %v1140 = vlaneseq
    %v1141 = vshrl.u32 %v1140, 7
    %v1142 = vsub.s32 %v1139, %v1141
    %v1143 = vrot.slane %v1129, %v1142
    %v1144 = vcombine.low %v1079, %v1095
    %v1145 = vcombine.high %v1079, %v1095
    %v1147 = vunpack.c.l.s4 1934713408
    %v1148 = vunpack.c.0.s8 %v1147
    %v1149 = vlaneseq
    %v1150 = vshrl.u32 %v1149, 7
    %v1151 = vsub.s32 %v1148, %v1150
    %v1152 = vrot.slane %v1144, %v1151
    %v1154 = vunpack.c.l.s4 1934713408
    %v1155 = vunpack.c.0.s8 %v1154
    %v1156 = vlaneseq
    %v1157 = vshrl.u32 %v1156, 7
    %v1158 = vsub.s32 %v1155, %v1157
    %v1159 = vrot.slane %v1145, %v1158
    %v1160 = vcombine.low %v1104, %v1136
    %v1161 = vcombine.high %v1104, %v1136
    %v1162 = vcombine.low %v1111, %v1143
    %v1163 = vcombine.high %v1111, %v1143
    %v1164 = vcombine.low %v1120, %v1152
    %v1165 = vcombine.high %v1120, %v1152
    %v1166 = vcombine.low %v1127, %v1159
    %v1167 = vcombine.high %v1127, %v1159
    %v1168 = vsel %vm510, %v1160, -inf
    %1169 = vmax.xlane.f32.xlu0 %v1168
    %v1170 = vpop.xlane.xlu0 %1169
    %v1171 = vsel %vm510, %v1161, -inf
    %1172 = vmax.xlane.f32.xlu0 %v1171
    %v1173 = vpop.xlane.xlu0 %1172
    %v1174 = vsel %vm510, %v1162, -inf
    %1175 = vmax.xlane.f32.xlu0 %v1174
    %v1176 = vpop.xlane.xlu0 %1175
    %v1177 = vsel %vm510, %v1163, -inf
    %1178 = vmax.xlane.f32.xlu0 %v1177
    %v1179 = vpop.xlane.xlu0 %1178
    %v1180 = vsel %vm510, %v1164, -inf
    %1181 = vmax.xlane.f32.xlu0 %v1180
    %v1182 = vpop.xlane.xlu0 %1181
    %v1183 = vsel %vm510, %v1165, -inf
    %1184 = vmax.xlane.f32.xlu0 %v1183
    %v1185 = vpop.xlane.xlu0 %1184
    %v1186 = vsel %vm510, %v1166, -inf
    %1187 = vmax.xlane.f32.xlu0 %v1186
    %v1188 = vpop.xlane.xlu0 %1187
    %v1189 = vsel %vm510, %v1167, -inf
    %1190 = vmax.xlane.f32.xlu0 %v1189
    %v1191 = vpop.xlane.xlu0 %1190
    %v1192 = vsub.f32 %v1160, %v1170
    %v1193 = vsub.f32 %v1161, %v1173
    %v1194 = vsub.f32 %v1162, %v1176
    %v1195 = vsub.f32 %v1163, %v1179
    %v1196 = vsub.f32 %v1164, %v1182
    %v1197 = vsub.f32 %v1165, %v1185
    %v1198 = vsub.f32 %v1166, %v1188
    %v1199 = vsub.f32 %v1167, %v1191
    %v1200 = vmul.f32 %v1192, 1.442695
    %v1201 = vpow.pop %v1200
    %v1202 = vmul.f32 %v1193, 1.442695
    %v1203 = vpow.pop %v1202
    %v1204 = vmul.f32 %v1194, 1.442695
    %v1205 = vpow.pop %v1204
    %v1206 = vmul.f32 %v1195, 1.442695
    %v1207 = vpow.pop %v1206
    %v1208 = vmul.f32 %v1196, 1.442695
    %v1209 = vpow.pop %v1208
    %v1210 = vmul.f32 %v1197, 1.442695
    %v1211 = vpow.pop %v1210
    %v1212 = vmul.f32 %v1198, 1.442695
    %v1213 = vpow.pop %v1212
    %v1214 = vmul.f32 %v1199, 1.442695
    %v1215 = vpow.pop %v1214
    %v1216 = vsel %vm510, %v1201, 0.0
    %1217 = vadd.xlane.f32.xlu0 %v1216
    %v1218 = vpop.xlane.xlu0 %1217
    %v1219 = vsel %vm510, %v1203, 0.0
    %1220 = vadd.xlane.f32.xlu0 %v1219
    %v1221 = vpop.xlane.xlu0 %1220
    %v1222 = vsel %vm510, %v1205, 0.0
    %1223 = vadd.xlane.f32.xlu0 %v1222
    %v1224 = vpop.xlane.xlu0 %1223
    %v1225 = vsel %vm510, %v1207, 0.0
    %1226 = vadd.xlane.f32.xlu0 %v1225
    %v1227 = vpop.xlane.xlu0 %1226
    %v1228 = vsel %vm510, %v1209, 0.0
    %1229 = vadd.xlane.f32.xlu0 %v1228
    %v1230 = vpop.xlane.xlu0 %1229
    %v1231 = vsel %vm510, %v1211, 0.0
    %1232 = vadd.xlane.f32.xlu0 %v1231
    %v1233 = vpop.xlane.xlu0 %1232
    %v1234 = vsel %vm510, %v1213, 0.0
    %1235 = vadd.xlane.f32.xlu0 %v1234
    %v1236 = vpop.xlane.xlu0 %1235
    %v1237 = vsel %vm510, %v1215, 0.0
    %1238 = vadd.xlane.f32.xlu0 %v1237
    %v1239 = vpop.xlane.xlu0 %1238
    %v1240 = vrcp.pop %v1218
    %v1241 = vmul.f32 %v1201, %v1240
    %v1242 = vrcp.pop %v1221
    %v1243 = vmul.f32 %v1203, %v1242
    %v1244 = vrcp.pop %v1224
    %v1245 = vmul.f32 %v1205, %v1244
    %v1246 = vrcp.pop %v1227
    %v1247 = vmul.f32 %v1207, %v1246
    %v1248 = vrcp.pop %v1230
    %v1249 = vmul.f32 %v1209, %v1248
    %v1250 = vrcp.pop %v1233
    %v1251 = vmul.f32 %v1211, %v1250
    %v1252 = vrcp.pop %v1236
    %v1253 = vmul.f32 %v1213, %v1252
    %v1254 = vrcp.pop %v1239
    %v1255 = vmul.f32 %v1215, %v1254
    %v1256 = vcombine.low %v1241, %v1245
    %v1257 = vcombine.high %v1241, %v1245
    %v1259 = vunpack.c.l.s4 1983009808
    %v1260 = vunpack.c.0.s8 %v1259
    %v1261 = vlaneseq
    %v1262 = vshrl.u32 %v1261, 7
    %v1263 = vsub.s32 %v1260, %v1262
    %v1264 = vrot.slane %v1256, %v1263
    %v1266 = vunpack.c.l.s4 1983009808
    %v1267 = vunpack.c.0.s8 %v1266
    %v1268 = vlaneseq
    %v1269 = vshrl.u32 %v1268, 7
    %v1270 = vsub.s32 %v1267, %v1269
    %v1271 = vrot.slane %v1257, %v1270
    %v1272 = vcombine.low %v1243, %v1247
    %v1273 = vcombine.high %v1243, %v1247
    %v1275 = vunpack.c.l.s4 1983009808
    %v1276 = vunpack.c.0.s8 %v1275
    %v1277 = vlaneseq
    %v1278 = vshrl.u32 %v1277, 7
    %v1279 = vsub.s32 %v1276, %v1278
    %v1280 = vrot.slane %v1272, %v1279
    %v1282 = vunpack.c.l.s4 1983009808
    %v1283 = vunpack.c.0.s8 %v1282
    %v1284 = vlaneseq
    %v1285 = vshrl.u32 %v1284, 7
    %v1286 = vsub.s32 %v1283, %v1285
    %v1287 = vrot.slane %v1273, %v1286
    %v1288 = vcombine.low %v1249, %v1253
    %v1289 = vcombine.high %v1249, %v1253
    %v1291 = vunpack.c.l.s4 1983009808
    %v1292 = vunpack.c.0.s8 %v1291
    %v1293 = vlaneseq
    %v1294 = vshrl.u32 %v1293, 7
    %v1295 = vsub.s32 %v1292, %v1294
    %v1296 = vrot.slane %v1288, %v1295
    %v1298 = vunpack.c.l.s4 1983009808
    %v1299 = vunpack.c.0.s8 %v1298
    %v1300 = vlaneseq
    %v1301 = vshrl.u32 %v1300, 7
    %v1302 = vsub.s32 %v1299, %v1301
    %v1303 = vrot.slane %v1289, %v1302
    %v1304 = vcombine.low %v1251, %v1255
    %v1305 = vcombine.high %v1251, %v1255
    %v1307 = vunpack.c.l.s4 1983009808
    %v1308 = vunpack.c.0.s8 %v1307
    %v1309 = vlaneseq
    %v1310 = vshrl.u32 %v1309, 7
    %v1311 = vsub.s32 %v1308, %v1310
    %v1312 = vrot.slane %v1304, %v1311
    %v1314 = vunpack.c.l.s4 1983009808
    %v1315 = vunpack.c.0.s8 %v1314
    %v1316 = vlaneseq
    %v1317 = vshrl.u32 %v1316, 7
    %v1318 = vsub.s32 %v1315, %v1317
    %v1319 = vrot.slane %v1305, %v1318
    %v1320 = vcombine.low %v1264, %v1280
    %v1321 = vcombine.high %v1264, %v1280
    %v1323 = vunpack.c.l.s4 1934713408
    %v1324 = vunpack.c.0.s8 %v1323
    %v1325 = vlaneseq
    %v1326 = vshrl.u32 %v1325, 7
    %v1327 = vsub.s32 %v1324, %v1326
    %v1328 = vrot.slane %v1320, %v1327
    %v1330 = vunpack.c.l.s4 1934713408
    %v1331 = vunpack.c.0.s8 %v1330
    %v1332 = vlaneseq
    %v1333 = vshrl.u32 %v1332, 7
    %v1334 = vsub.s32 %v1331, %v1333
    %v1335 = vrot.slane %v1321, %v1334
    %v1336 = vcombine.low %v1271, %v1287
    %v1337 = vcombine.high %v1271, %v1287
    %v1339 = vunpack.c.l.s4 1934713408
    %v1340 = vunpack.c.0.s8 %v1339
    %v1341 = vlaneseq
    %v1342 = vshrl.u32 %v1341, 7
    %v1343 = vsub.s32 %v1340, %v1342
    %v1344 = vrot.slane %v1336, %v1343
    %v1346 = vunpack.c.l.s4 1934713408
    %v1347 = vunpack.c.0.s8 %v1346
    %v1348 = vlaneseq
    %v1349 = vshrl.u32 %v1348, 7
    %v1350 = vsub.s32 %v1347, %v1349
    %v1351 = vrot.slane %v1337, %v1350
    %v1352 = vcombine.low %v1296, %v1312
    %v1353 = vcombine.high %v1296, %v1312
    %v1355 = vunpack.c.l.s4 1934713408
    %v1356 = vunpack.c.0.s8 %v1355
    %v1357 = vlaneseq
    %v1358 = vshrl.u32 %v1357, 7
    %v1359 = vsub.s32 %v1356, %v1358
    %v1360 = vrot.slane %v1352, %v1359
    %v1362 = vunpack.c.l.s4 1934713408
    %v1363 = vunpack.c.0.s8 %v1362
    %v1364 = vlaneseq
    %v1365 = vshrl.u32 %v1364, 7
    %v1366 = vsub.s32 %v1363, %v1365
    %v1367 = vrot.slane %v1353, %v1366
    %v1368 = vcombine.low %v1303, %v1319
    %v1369 = vcombine.high %v1303, %v1319
    %v1371 = vunpack.c.l.s4 1934713408
    %v1372 = vunpack.c.0.s8 %v1371
    %v1373 = vlaneseq
    %v1374 = vshrl.u32 %v1373, 7
    %v1375 = vsub.s32 %v1372, %v1374
    %v1376 = vrot.slane %v1368, %v1375
    %v1378 = vunpack.c.l.s4 1934713408
    %v1379 = vunpack.c.0.s8 %v1378
    %v1380 = vlaneseq
    %v1381 = vshrl.u32 %v1380, 7
    %v1382 = vsub.s32 %v1379, %v1381
    %v1383 = vrot.slane %v1369, %v1382
    %v1384 = vcombine.low %v1328, %v1360
    %v1385 = vcombine.high %v1328, %v1360
    %v1386 = vcombine.low %v1335, %v1367
    %v1387 = vcombine.high %v1335, %v1367
    %v1388 = vcombine.low %v1344, %v1376
    %v1389 = vcombine.high %v1344, %v1376
    %v1390 = vcombine.low %v1351, %v1383
    %v1391 = vcombine.high %v1351, %v1383
    %1393 = vrot.lane.b32.xlu0 %v1385, 8
    %v1394 = vpop.permute.xlu0 %1393
    %1397 = vrot.lane.b32.xlu0 %v1386, 16
    %v1398 = vpop.permute.xlu0 %1397
    %1401 = vrot.lane.b32.xlu0 %v1387, 24
    %v1402 = vpop.permute.xlu0 %1401
    %1405 = vrot.lane.b32.xlu0 %v1388, 32
    %v1406 = vpop.permute.xlu0 %1405
    %1409 = vrot.lane.b32.xlu0 %v1389, 40
    %v1410 = vpop.permute.xlu0 %1409
    %1413 = vrot.lane.b32.xlu0 %v1390, 48
    %v1414 = vpop.permute.xlu0 %1413
    %1417 = vrot.lane.b32.xlu0 %v1391, 56
    %v1418 = vpop.permute.xlu0 %1417
    %v1420 = vsel %vm510, %v1384, %v1394
    %v1421 = vsel %vm764, %v1420, %v1398
    %v1422 = vsel %vm766, %v1421, %v1402
    %v1423 = vsel %vm262, %v1422, %v1406
    %v1424 = vsel %vm769, %v1423, %v1410
    %v1425 = vsel %vm771, %v1424, %v1414
    %v1426 = vsel %vm773, %v1425, %v1418
    %1435 = vrot.lane.b32.xlu0 %v889, 64
    %v1436 = vpop.permute.xlu0 %1435
    %1437 = vrot.lane.b32.xlu0 %v890, 64
    %v1438 = vpop.permute.xlu0 %1437
    %1439 = vrot.lane.b32.xlu0 %v891, 64
    %v1440 = vpop.permute.xlu0 %1439
    %1441 = vrot.lane.b32.xlu0 %v892, 64
    %v1442 = vpop.permute.xlu0 %1441
    %1443 = vrot.lane.b32.xlu0 %v893, 64
    %v1444 = vpop.permute.xlu0 %1443
    %1445 = vrot.lane.b32.xlu0 %v894, 64
    %v1446 = vpop.permute.xlu0 %1445
    %1447 = vrot.lane.b32.xlu0 %v895, 64
    %v1448 = vpop.permute.xlu0 %1447
    %1449 = vrot.lane.b32.xlu0 %v896, 64
    %v1450 = vpop.permute.xlu0 %1449
    %v1460 = vsel %vm807, %v1426, 0
    %1462 = vmatprep.subr.mxu0 0.0
    %1463 = vmatpush1.msra.mxu0 0.0
    %1464 = vmatprep.subr.mxu0 0.0
    %1465 = vmatpush1.msra.mxu0 0.0
    %1466 = vmatprep.subr.mxu0 0.0
    %1467 = vmatpush1.msra.mxu0 0.0
    %1468 = vmatprep.subr.mxu0 0.0
    %1469 = vmatpush1.msra.mxu0 0.0
    %1470 = vmatprep.subr.mxu0 0.0
    %1471 = vmatpush1.msra.mxu0 0.0
    %1472 = vmatprep.subr.mxu0 0.0
    %1473 = vmatpush1.msra.mxu0 0.0
    %1474 = vmatprep.subr.mxu0 0.0
    %1475 = vmatpush1.msra.mxu0 0.0
    %1476 = vmatprep.subr.mxu0 0.0
    %1477 = vmatpush1.msra.mxu0 0.0
    %1478 = vmatprep.subr.mxu0 0.0
    %1479 = vmatpush1.msra.mxu0 %v1450
    %1480 = vmatprep.subr.mxu0 0.0
    %1481 = vmatpush1.msra.mxu0 %v1448
    %1482 = vmatprep.subr.mxu0 0.0
    %1483 = vmatpush1.msra.mxu0 %v1446
    %1484 = vmatprep.subr.mxu0 0.0
    %1485 = vmatpush1.msra.mxu0 %v1444
    %1486 = vmatprep.subr.mxu0 0.0
    %1487 = vmatpush1.msra.mxu0 %v1442
    %1488 = vmatprep.subr.mxu0 0.0
    %1489 = vmatpush1.msra.mxu0 %v1440
    %1490 = vmatprep.subr.mxu0 0.0
    %1491 = vmatpush1.msra.mxu0 %v1438
    %1492 = vmatprep.subr.mxu0 0.0
    %1493 = vmatpush1.msra.mxu0 %v1436
    %1494 = vmatprep.subr.mxu0 0.0
    %1495 = vmatpush2.msra.mxu0 0.0
    %1496 = vmatprep.subr.mxu0 0.0
    %1497 = vmatpush2.msra.mxu0 0.0
    %1498 = vmatprep.subr.mxu0 0.0
    %1499 = vmatpush2.msra.mxu0 0.0
    %1500 = vmatprep.subr.mxu0 0.0
    %1501 = vmatpush2.msra.mxu0 0.0
    %1502 = vmatprep.subr.mxu0 0.0
    %1503 = vmatpush2.msra.mxu0 0.0
    %1504 = vmatprep.subr.mxu0 0.0
    %1505 = vmatpush2.msra.mxu0 0.0
    %1506 = vmatprep.subr.mxu0 0.0
    %1507 = vmatpush2.msra.mxu0 0.0
    %1508 = vmatprep.subr.mxu0 0.0
    %1509 = vmatpush2.msra.mxu0 0.0
    %1510 = vmatprep.subr.mxu0 0.0
    %1511 = vmatpush2.msra.mxu0 0.0
    %1512 = vmatprep.subr.mxu0 0.0
    %1513 = vmatpush2.msra.mxu0 0.0
    %1514 = vmatprep.subr.mxu0 0.0
    %1515 = vmatpush2.msra.mxu0 0.0
    %1516 = vmatprep.subr.mxu0 0.0
    %1517 = vmatpush2.msra.mxu0 0.0
    %1518 = vmatprep.subr.mxu0 0.0
    %1519 = vmatpush2.msra.mxu0 0.0
    %1520 = vmatprep.subr.mxu0 0.0
    %1521 = vmatpush2.msra.mxu0 0.0
    %1522 = vmatprep.subr.mxu0 0.0
    %1523 = vmatpush2.msra.mxu0 0.0
    %1524 = vmatprep.subr.mxu0 0.0
    %1525 = vmatpush2.msra.mxu0 0.0
    %1526 = vmatprep.mubr.f32.mxu0 0.0
    %1527 = vmatmul.mubr.f32.gmra.mxu0 %v1460
    %v1528 = vpop.f32.mrf.mxu0
    %v1529 = vadd.f32 0.0, %v1528
    %v1530 = vpop.f32.mrf.mxu0
    %1531 = vdwg.mxu0
    %1532 = vrot.lane.b32.xlu0 %v1426, 64
    %v1533 = vpop.permute.xlu0 %1532
    %v1535 = vsel %vm807, %v774, %v1533
    %1536 = vst [vmem:[#allocation8] sm:$0xff] %v1535
    %v1537 = vld [vmem:[#allocation5] sm:$0xff]
    %v1538 = vld [vmem:[#allocation5 + $0x8] sm:$0xff]
    %v1539 = vld [vmem:[#allocation5 + $0x10] sm:$0xff]
    %v1540 = vld [vmem:[#allocation5 + $0x18] sm:$0xff]
    %v1541 = vld [vmem:[%s5] sm:$0x1]
    %v1543 = vlaneseq
    %v1544 = vshrl.u32 %v1543, 7
    %v1545 = vsub.s32 0, %v1544
    %v1546 = vrot.slane %v1541, %v1545
    %v1549 = vsel %vm262, %v878, 0
    %v1552 = vsel %vm262, %v1529, 0
    %1554 = vmatprep.subr.mxu0 0.0
    %1555 = vmatpush1.msra.mxu0 0.0
    %1556 = vmatprep.subr.mxu0 0.0
    %1557 = vmatpush1.msra.mxu0 0.0
    %1558 = vmatprep.subr.mxu0 0.0
    %1559 = vmatpush1.msra.mxu0 0.0
    %1560 = vmatprep.subr.mxu0 0.0
    %1561 = vmatpush1.msra.mxu0 0.0
    %1562 = vmatprep.subr.mxu0 0.0
    %1563 = vmatpush1.msra.mxu0 0.0
    %1564 = vmatprep.subr.mxu0 0.0
    %1565 = vmatpush1.msra.mxu0 0.0
    %1566 = vmatprep.subr.mxu0 0.0
    %1567 = vmatpush1.msra.mxu0 0.0
    %1568 = vmatprep.subr.mxu0 0.0
    %1569 = vmatpush1.msra.mxu0 0.0
    %1570 = vmatprep.subr.mxu0 0.0
    %1571 = vmatpush1.msra.mxu0 0.0
    %1572 = vmatprep.subr.mxu0 0.0
    %1573 = vmatpush1.msra.mxu0 0.0
    %1574 = vmatprep.subr.mxu0 0.0
    %1575 = vmatpush1.msra.mxu0 0.0
    %1576 = vmatprep.subr.mxu0 0.0
    %1577 = vmatpush1.msra.mxu0 0.0
    %1578 = vmatprep.subr.mxu0 0.0
    %1579 = vmatpush1.msra.mxu0 %v1540
    %1580 = vmatprep.subr.mxu0 0.0
    %1581 = vmatpush1.msra.mxu0 %v1539
    %1582 = vmatprep.subr.mxu0 0.0
    %1583 = vmatpush1.msra.mxu0 %v1538
    %1584 = vmatprep.subr.mxu0 0.0
    %1585 = vmatpush1.msra.mxu0 %v1537
    %1586 = vmatprep.subr.mxu0 0.0
    %1587 = vmatpush2.msra.mxu0 0.0
    %1588 = vmatprep.subr.mxu0 0.0
    %1589 = vmatpush2.msra.mxu0 0.0
    %1590 = vmatprep.subr.mxu0 0.0
    %1591 = vmatpush2.msra.mxu0 0.0
    %1592 = vmatprep.subr.mxu0 0.0
    %1593 = vmatpush2.msra.mxu0 0.0
    %1594 = vmatprep.subr.mxu0 0.0
    %1595 = vmatpush2.msra.mxu0 0.0
    %1596 = vmatprep.subr.mxu0 0.0
    %1597 = vmatpush2.msra.mxu0 0.0
    %1598 = vmatprep.subr.mxu0 0.0
    %1599 = vmatpush2.msra.mxu0 0.0
    %1600 = vmatprep.subr.mxu0 0.0
    %1601 = vmatpush2.msra.mxu0 0.0
    %1602 = vmatprep.subr.mxu0 0.0
    %1603 = vmatpush2.msra.mxu0 0.0
    %1604 = vmatprep.subr.mxu0 0.0
    %1605 = vmatpush2.msra.mxu0 0.0
    %1606 = vmatprep.subr.mxu0 0.0
    %1607 = vmatpush2.msra.mxu0 0.0
    %1608 = vmatprep.subr.mxu0 0.0
    %1609 = vmatpush2.msra.mxu0 0.0
    %1610 = vmatprep.subr.mxu0 0.0
    %1611 = vmatpush2.msra.mxu0 0.0
    %1612 = vmatprep.subr.mxu0 0.0
    %1613 = vmatpush2.msra.mxu0 0.0
    %1614 = vmatprep.subr.mxu0 0.0
    %1615 = vmatpush2.msra.mxu0 0.0
    %1616 = vmatprep.subr.mxu0 0.0
    %1617 = vmatpush2.msra.mxu0 0.0
    %1618 = vmatprep.mubr.f32.mxu0 0.0
    %1619 = vmatmul.mubr.f32.gmra.mxu0 %v1549
    %v1620 = vpop.f32.mrf.mxu0
    %v1621 = vadd.f32 %v1546, %v1620
    %v1622 = vpop.f32.mrf.mxu0
    %1623 = vmatprep.mubr.f32.mxu0 0.0
    %1624 = vmatmul.mubr.f32.gmra.mxu0 %v1552
    %v1625 = vpop.f32.mrf.mxu0
    %v1626 = vadd.f32 %v1546, %v1625
    %v1627 = vpop.f32.mrf.mxu0
    %1628 = vdwg.mxu0
    %1629 = vst.msk [vmem:[#allocation7] sm:$0xff] %vm262, %v1621
    %1630 = vst.msk [vmem:[#allocation7 + $0x8] sm:$0xff] %vm262, %v1626
    // Predicated region
    $region34: #{tpu_custom_call.1} parent=1 // pred_check
      _
    $region35: #{tpu_custom_call.1} parent=1 // pred_check_branch
      %1632 = sbr.rel (0) target = $region37
    $region36: #{tpu_custom_call.1} parent=1 // pred_region
      %s1634 = ssub.s32 256, 256
      %1635 = vsyncadd [#allocation4], %s1634
      %s1636 = sshll.u32 [#allocation7], 4
      %s1637 = int_to_ptr.vmem [resolvable:$true] %s1636
      %1642 = dma.vmem_to_hbm [thread:$0]  %s1637, 256, %s6, [#allocation4], 128, 128, 8
    $region37: #{tpu_custom_call.1} parent=1 // pred_fallthru
      _
    // Predicated region
    $region38: #{tpu_custom_call.1} parent=1 // pred_check
      _
    $region39: #{tpu_custom_call.1} parent=1 // pred_check_branch
      %1644 = sbr.rel (0) target = $region41
    $region40: #{tpu_custom_call.1} parent=1 // pred_region
      %s1646 = ssub.s32 128, 128
      %1647 = vsyncadd [#allocation9], %s1646
      %s1649 = sshll.u32 [#allocation8], 4
      %s1650 = int_to_ptr.vmem [resolvable:$true] %s1649
      %1652 = dma.vmem_to_hbm [thread:$0]  %s1650, 128, %s7, [#allocation9]
    $region41: #{tpu_custom_call.1} parent=1 // pred_fallthru
      _
    // Predicated region
    $region42: #{tpu_custom_call.1} parent=1 // pred_check
      _
    $region43: #{tpu_custom_call.1} parent=1 // pred_check_branch
      %1654 = sbr.rel (0) target = $region45
    $region44: #{tpu_custom_call.1} parent=1 // pred_region
      %1655 = dma.done [#allocation4], 256
    $region45: #{tpu_custom_call.1} parent=1 // pred_fallthru
      _
    // Predicated region
    $region46: #{tpu_custom_call.1} parent=1 // pred_check
      _
    $region47: #{tpu_custom_call.1} parent=1 // pred_check_branch
      %1657 = sbr.rel (0) target = $region49
    $region48: #{tpu_custom_call.1} parent=1 // pred_region
      %1658 = dma.done [#allocation9], 128
    $region49: #{tpu_custom_call.1} parent=1 // pred_fallthru
      _
    %1659 = vsyncpa [#allocation3], 1
    %1660 = vsyncpa [#allocation6], 1
    %1661 = vsyncpa [#allocation4], 1
    %1662 = vsyncpa [#allocation9], 1

</llo_original>
